<compile_context>
chip_gen: v7x
topology: tpu7x:2x2x1
jax: 0.10.0
libtpu: 0.0.40
codegen_flags: <defaults>
</compile_context>

<pallas_src>
import math
import functools

import jax
import jax.numpy as jnp
from jax import lax
from jax.experimental import pallas as pl
from jax.experimental.pallas import tpu as pltpu

LN_EPS = 1e-5


def _tpu_kind():
    try:
        return jax.devices()[0].device_kind.lower()
    except Exception:
        return ""


_KIND = _tpu_kind()
_BIG_VMEM = ("v5" in _KIND) or ("v6" in _KIND)   # 128 MiB VMEM parts

if _BIG_VMEM:
    TM, TN, TK = 1024, 512, 1024      # row / out-feature / reduction tile targets
    TQ = 512                          # attention q-row tile target
    VMEM_LIMIT = 100 * 1024 * 1024
else:                                 # v7x (64 MiB physical VMEM) or unknown
    TM, TN, TK = 512, 512, 1024
    TQ = 256
    VMEM_LIMIT = 48 * 1024 * 1024


def _pick_tile(dim, target, base):
    """Largest tile <= target that divides `dim` and is a multiple of `base`;
    falls back to the full dim (always legal for BlockSpec) otherwise."""
    if dim <= target:
        return dim
    t = (target // base) * base
    while t >= base:
        if dim % t == 0:
            return t
        t -= base
    return dim


# ----------------------------- Pallas kernels ------------------------------

def _ln_linear_kernel(x_ref, g_ref, b_ref, w_ref, bias_ref, o_ref, h_ref, *, activation):
    """Fused LayerNorm -> matmul (+bias) [+ QuickGELU].

    x block is (tm, D) with the FULL feature dim so the LN reduction stays in one
    tile.  LN is computed once per row tile (grid axis j == 0) into a bf16 VMEM
    scratch and reused for every output-feature tile.
    """
    @pl.when(pl.program_id(1) == 0)
    def _():
        x = x_ref[...].astype(jnp.float32)
        mean = jnp.mean(x, axis=-1, keepdims=True)
        var = jnp.mean(jnp.square(x - mean), axis=-1, keepdims=True)
        h = (x - mean) * lax.rsqrt(var + LN_EPS) * g_ref[...] + b_ref[...]
        h_ref[...] = h.astype(h_ref.dtype)          # bf16 MXU operand, cached

    y = jnp.dot(h_ref[...], w_ref[...], preferred_element_type=jnp.float32)
    y = y + bias_ref[...]
    if activation == "quickgelu":
        y = y * jax.nn.sigmoid(1.702 * y)
    o_ref[...] = y.astype(o_ref.dtype)


def _linear_residual_kernel(x_ref, w_ref, bias_ref, res_ref, o_ref, acc_ref):
    """K-tiled bf16 matmul with f32 accumulator; bias + residual fused into the
    finalize step (out = residual + x @ w + bias)."""
    @pl.when(pl.program_id(2) == 0)
    def _():
        acc_ref[...] = jnp.zeros_like(acc_ref)

    acc_ref[...] += jnp.dot(x_ref[...], w_ref[...],
                            preferred_element_type=jnp.float32)

    @pl.when(pl.program_id(2) == pl.num_programs(2) - 1)
    def _():
        y = acc_ref[...] + bias_ref[...] + res_ref[...].astype(jnp.float32)
        o_ref[...] = y.astype(o_ref.dtype)


def _mha_outproj_kernel(qkv_ref, wo_ref, bo_ref, res_ref, o_ref, acc_ref,
                        *, heads, scale, tq):
    """Multi-head attention + fused out_proj + bias + residual.

    One (batch, q-row-tile) per grid step.  qkv block: (1, L, 3D) packed
    [q | k | v] (PyTorch in_proj layout), resident in VMEM across q tiles.
    Per head: softmax(q k^T * scale) v, then o_h @ W_out[h*dh:(h+1)*dh, :]
    accumulated into a (tq, D) f32 scratch (no concatenate, no extra HBM trip).
    """
    d3 = qkv_ref.shape[-1]
    d = d3 // 3
    dh = d // heads

    q_start = pl.multiple_of(pl.program_id(1) * tq, tq)

    acc_ref[...] = jnp.zeros_like(acc_ref)
    for h in range(heads):                               # static unroll over heads
        q = qkv_ref[0, pl.ds(q_start, tq), h * dh:(h + 1) * dh]          # (tq, dh)
        k = qkv_ref[0, :, d + h * dh:d + (h + 1) * dh]                   # (L,  dh)
        v = qkv_ref[0, :, 2 * d + h * dh:2 * d + (h + 1) * dh]           # (L,  dh)

        s = lax.dot_general(q, k, (((1,), (1,)), ((), ())),
                            preferred_element_type=jnp.float32) * scale   # (tq, L)
        s = s - jnp.max(s, axis=-1, keepdims=True)
        p = jnp.exp(s)
        # approx reciprocal runs on the EUP slot; ~1e-3 rel. error (see tolerance).
        p = p * pl.reciprocal(jnp.sum(p, axis=-1, keepdims=True), approx=True)

        o_h = jnp.dot(p.astype(v.dtype), v, preferred_element_type=jnp.float32)
        # fused out_proj: o_h @ W_out rows for this head, accumulated in f32.
        acc_ref[...] += jnp.dot(o_h.astype(wo_ref.dtype),
                                wo_ref[h * dh:(h + 1) * dh, :],
                                preferred_element_type=jnp.float32)

    y = acc_ref[...] + bo_ref[...] + res_ref[0].astype(jnp.float32)
    o_ref[0] = y.astype(o_ref.dtype)


# ---------------------------- Pallas wrappers -------------------------------

def ln_linear(x2d, gamma, beta, w_kn, bias, activation=None):
    """bf16 out = [QuickGELU](LayerNorm(x2d) @ w_kn + bias).  x2d: (M, K) f32,
    w_kn: (K, N) bf16."""
    M, K = x2d.shape
    Nout = w_kn.shape[1]
    tm = _pick_tile(M, TM, 16)          # 16-row base: bf16 scratch/output packing
    tn = _pick_tile(Nout, TN, 128)
    kern = functools.partial(_ln_linear_kernel, activation=activation)
    return pl.pallas_call(
        kern,
        out_shape=jax.ShapeDtypeStruct((M, Nout), jnp.bfloat16),
        grid=(M // tm, Nout // tn),
        in_specs=[
            pl.BlockSpec((tm, K), lambda i, j: (i, 0)),
            pl.BlockSpec((1, K), lambda i, j: (0, 0)),
            pl.BlockSpec((1, K), lambda i, j: (0, 0)),
            pl.BlockSpec((K, tn), lambda i, j: (0, j)),
            pl.BlockSpec((1, tn), lambda i, j: (0, j)),
        ],
        out_specs=pl.BlockSpec((tm, tn), lambda i, j: (i, j)),
        scratch_shapes=[pltpu.VMEM((tm, K), jnp.bfloat16)],   # cached LN output
        compiler_params=pltpu.CompilerParams(
            # j is 'arbitrary': the cached-LN scratch is written at j==0 and
            # consumed by the remaining j steps of the same row tile.
            dimension_semantics=("parallel", "arbitrary"),
            vmem_limit_bytes=VMEM_LIMIT),
    )(x2d, gamma, beta, w_kn, bias)


def linear_residual(x2d, w_kn, bias, residual):
    """f32 out = residual + x2d @ w_kn + bias.  x2d: (M, K) bf16, w_kn: (K, N) bf16."""
    M, K = x2d.shape
    Nout = w_kn.shape[1]
    tm = _pick_tile(M, TM, 16)
    tn = _pick_tile(Nout, TN, 128)
    tk = _pick_tile(K, TK, 128)
    return pl.pallas_call(
        _linear_residual_kernel,
        out_shape=jax.ShapeDtypeStruct((M, Nout), residual.dtype),
        grid=(M // tm, Nout // tn, K // tk),
        in_specs=[
            pl.BlockSpec((tm, tk), lambda i, j, k: (i, k)),
            pl.BlockSpec((tk, tn), lambda i, j, k: (k, j)),
            pl.BlockSpec((1, tn), lambda i, j, k: (0, j)),
            pl.BlockSpec((tm, tn), lambda i, j, k: (i, j)),
        ],
        out_specs=pl.BlockSpec((tm, tn), lambda i, j, k: (i, j)),
        scratch_shapes=[pltpu.VMEM((tm, tn), jnp.float32)],
        compiler_params=pltpu.CompilerParams(
            dimension_semantics=("parallel", "parallel", "arbitrary"),
            vmem_limit_bytes=VMEM_LIMIT),
    )(x2d, w_kn, bias, residual)


def mha_outproj(qkv3, wo, bo, residual3, heads):
    """qkv3: (N, L, 3D) bf16 packed projections; wo: (D, D) bf16 (in, out) layout;
    residual3: (N, L, D) f32.  Returns residual + MHA(qkv) @ wo + bo, (N, L, D) f32."""
    N, L, D3 = qkv3.shape
    D = D3 // 3
    assert D % heads == 0, "width must be divisible by heads"
    scale = 1.0 / math.sqrt(D // heads)
    tq = _pick_tile(L, TQ, 16)
    kern = functools.partial(_mha_outproj_kernel, heads=heads, scale=scale, tq=tq)
    return pl.pallas_call(
        kern,
        out_shape=jax.ShapeDtypeStruct((N, L, D), residual3.dtype),
        grid=(N, L // tq),
        in_specs=[
            pl.BlockSpec((1, L, D3), lambda n, qi: (n, 0, 0)),   # resident across qi
            pl.BlockSpec((D, D), lambda n, qi: (0, 0)),          # out_proj weight, resident
            pl.BlockSpec((1, D), lambda n, qi: (0, 0)),
            pl.BlockSpec((1, tq, D), lambda n, qi: (n, qi, 0)),
        ],
        out_specs=pl.BlockSpec((1, tq, D), lambda n, qi: (n, qi, 0)),
        scratch_shapes=[pltpu.VMEM((tq, D), jnp.float32)],
        compiler_params=pltpu.CompilerParams(
            dimension_semantics=("parallel", "parallel"),
            vmem_limit_bytes=VMEM_LIMIT),
    )(qkv3, wo, bo, residual3)


# --------------------------- Transformer forward ----------------------------

def _residual_attention_block(x2, p, heads, n_batch, seq_len):
    """x2: (N*L, D) batch-major f32 residual stream."""
    M, D = x2.shape

    # ---- attention branch: x = x + out_proj(MHA(ln_1(x)))  (out_proj fused) ----
    qkv = ln_linear(x2, p["ln1_g"], p["ln1_b"], p["in_proj_w_t"], p["in_proj_b"])
    x3 = mha_outproj(qkv.reshape(n_batch, seq_len, 3 * D),
                     p["out_proj_w_t"], p["out_proj_b"],
                     x2.reshape(n_batch, seq_len, D), heads)
    x2 = x3.reshape(M, D)

    # ---- MLP branch: x = x + c_proj(QuickGELU(c_fc(ln_2(x)))) ----
    h = ln_linear(x2, p["ln2_g"], p["ln2_b"], p["fc_w_t"], p["fc_b"],
                  activation="quickgelu")
    x2 = linear_residual(h, p["proj_w_t"], p["proj_b"], x2)
    return x2


@functools.partial(jax.jit, static_argnames=("heads",))
def transformer_forward(x, params, heads):
    L, N, D = x.shape
    # One transpose per forward to batch-major rows (reshapes afterwards are free).
    x2 = x.transpose(1, 0, 2).reshape(N * L, D)
    for p in params:
        x2 = _residual_attention_block(x2, p, heads, N, L)
    return x2.reshape(N, L, D).transpose(1, 0, 2)


# ------------------------------ Parameters ----------------------------------

def init_params(key, width, layers):
    """PyTorch-layout parameters (Linear weights are (out, in)), f32."""
    params = []
    for _ in range(layers):
        ks = jax.random.split(key, 9)
        key = ks[0]
        s = 0.02
        params.append({
            "ln1_g": jnp.ones((width,), jnp.float32),
            "ln1_b": jnp.zeros((width,), jnp.float32),
            "in_proj_w": s * jax.random.normal(ks[1], (3 * width, width), jnp.float32),
            "in_proj_b": s * jax.random.normal(ks[2], (3 * width,), jnp.float32),
            "out_proj_w": s * jax.random.normal(ks[3], (width, width), jnp.float32),
            "out_proj_b": s * jax.random.normal(ks[4], (width,), jnp.float32),
            "ln2_g": jnp.ones((width,), jnp.float32),
            "ln2_b": jnp.zeros((width,), jnp.float32),
            "fc_w": s * jax.random.normal(ks[5], (4 * width, width), jnp.float32),
            "fc_b": s * jax.random.normal(ks[6], (4 * width,), jnp.float32),
            "proj_w": s * jax.random.normal(ks[7], (width, 4 * width), jnp.float32),
            "proj_b": s * jax.random.normal(ks[8], (width,), jnp.float32),
        })
    return params


def prepare_params(params):
    """One-time prep: transpose weights to (K, N), cast projection weights to bf16
    (MXU operands), reshape vectors to 2-D.  Biases / LN params stay f32 (they feed
    the f32 accumulators and LN math)."""
    prepped = []
    for p in params:
        prepped.append({
            "ln1_g": p["ln1_g"].reshape(1, -1).astype(jnp.float32),
            "ln1_b": p["ln1_b"].reshape(1, -1).astype(jnp.float32),
            "in_proj_w_t": p["in_proj_w"].T.astype(jnp.bfloat16),     # (D, 3D)
            "in_proj_b": p["in_proj_b"].reshape(1, -1).astype(jnp.float32),
            "out_proj_w_t": p["out_proj_w"].T.astype(jnp.bfloat16),   # (D, D)
            "out_proj_b": p["out_proj_b"].reshape(1, -1).astype(jnp.float32),
            "ln2_g": p["ln2_g"].reshape(1, -1).astype(jnp.float32),
            "ln2_b": p["ln2_b"].reshape(1, -1).astype(jnp.float32),
            "fc_w_t": p["fc_w"].T.astype(jnp.bfloat16),               # (D, 4D)
            "fc_b": p["fc_b"].reshape(1, -1).astype(jnp.float32),
            "proj_w_t": p["proj_w"].T.astype(jnp.bfloat16),           # (4D, D)
            "proj_b": p["proj_b"].reshape(1, -1).astype(jnp.float32),
        })
    return prepped


# ---------------------------- Pure-JAX reference ----------------------------

def _ref_block(x, p, heads):
    L, N, D = x.shape
    dh = D // heads

    def ln(v, g, b):
        m = v.mean(-1, keepdims=True)
        var = ((v - m) ** 2).mean(-1, keepdims=True)
        return (v - m) * lax.rsqrt(var + LN_EPS) * g + b

    h = ln(x, p["ln1_g"], p["ln1_b"])
    qkv = h @ p["in_proj_w"].T + p["in_proj_b"]
    qkv = qkv.reshape(L, N, 3, heads, dh)
    q, k, v = (qkv[:, :, i].transpose(1, 2, 0, 3) for i in range(3))   # (N,H,L,dh)
    s = jnp.einsum("nhld,nhmd->nhlm", q, k) / math.sqrt(dh)
    a = jax.nn.softmax(s, axis=-1)
    o = jnp.einsum("nhlm,nhmd->nhld", a, v).transpose(2, 0, 1, 3).reshape(L, N, D)
    o = o @ p["out_proj_w"].T + p["out_proj_b"]
    x = x + o
    h = ln(x, p["ln2_g"], p["ln2_b"])
    h = h @ p["fc_w"].T + p["fc_b"]
    h = h * jax.nn.sigmoid(1.702 * h)
    h = h @ p["proj_w"].T + p["proj_b"]
    return x + h


def transformer_ref(x, params, heads):
    for p in params:
        x = _ref_block(x, p, heads)
    return x


# ---------------------------------- main -------------------------------------

if __name__ == "__main__":
    width, layers, heads = 32, 2, 4
    L, N = 8, 2                                  # seq_len, batch

    key = jax.random.PRNGKey(0)
    k_x, k_p = jax.random.split(key)
    x = jax.random.normal(k_x, (L, N, width), jnp.float32)
    params = init_params(k_p, width, layers)
    prepped = prepare_params(params)

    out = jax.block_until_ready(transformer_forward(x, prepped, heads=heads))
    ref = jax.block_until_ready(transformer_ref(x, params, heads))

    assert out.shape == (L, N, width)
    err = float(jnp.max(jnp.abs(out - ref)))
    # Tolerance reflects the intentional numerics: bf16 MXU operands for every
    # projection / attention matmul (f32 reference) plus the EUP approx reciprocal
    # in the softmax normalization; observed error is ~1e-3 at these shapes.
    assert jnp.allclose(out, ref, atol=2e-2, rtol=2e-2), f"max abs err {err}"
    print("KERNEL_OK")
</pallas_src>

<mosaic_0001>
module attributes {stable_mosaic.version = 11 : i64} {
  func.func @_ln_linear_kernel(%arg0: i32, %arg1: i32, %arg2: memref<16x32xf32, #tpu.memory_space<vmem>>, %arg3: memref<1x32xf32, #tpu.memory_space<vmem>>, %arg4: memref<1x32xf32, #tpu.memory_space<vmem>>, %arg5: memref<32x96xbf16, #tpu.memory_space<vmem>>, %arg6: memref<1x96xf32, #tpu.memory_space<vmem>>, %arg7: memref<16x96xbf16, #tpu.memory_space<vmem>>, %arg8: memref<16x32xbf16, #tpu.memory_space<vmem>>) attributes {dimension_semantics = [#tpu.dimension_semantics<parallel>, #tpu.dimension_semantics<arbitrary>], iteration_bounds = array<i64: 1, 1>, scalar_prefetch = 0 : i64, scratch_operands = 1 : i64, tpu.core_type = #tpu.core_type<tc>, window_params = [{transform_indices = @transform_0, window_bounds = array<i64: 16, 32>}, {pipeline_mode = #tpu.pipeline_mode<synchronous>, transform_indices = @transform_1, window_bounds = array<i64: 1, 32>}, {pipeline_mode = #tpu.pipeline_mode<synchronous>, transform_indices = @transform_2, window_bounds = array<i64: 1, 32>}, {transform_indices = @transform_3, window_bounds = array<i64: 32, 96>}, {transform_indices = @transform_4, window_bounds = array<i64: 1, 96>}, {transform_indices = @transform_5, window_bounds = array<i64: 16, 96>}]} {
    %c0_i32 = arith.constant 0 : i32
    %0 = arith.cmpi eq, %arg1, %c0_i32 : i32
    %1 = arith.extui %0 : i1 to i32
    %c0_i32_0 = arith.constant 0 : i32
    %2 = arith.cmpi ne, %1, %c0_i32_0 : i32
    scf.if %2 {
      %c0_8 = arith.constant 0 : index
      %c0_9 = arith.constant 0 : index
      %11 = vector.load %arg2[%c0_8, %c0_9] : memref<16x32xf32, #tpu.memory_space<vmem>>, vector<16x32xf32>
      %cst_10 = arith.constant dense<0.000000e+00> : vector<16xf32>
      %12 = vector.multi_reduction <add>, %11, %cst_10 [1] : vector<16x32xf32> to vector<16xf32>
      %13 = vector.shape_cast %12 : vector<16xf32> to vector<16x1xf32>
      %cst_11 = arith.constant 3.200000e+01 : f32
      %14 = vector.broadcast %cst_11 : f32 to vector<16x1xf32>
      %15 = arith.divf %13, %14 : vector<16x1xf32>
      %16 = vector.broadcast %15 : vector<16x1xf32> to vector<16x32xf32>
      %17 = arith.subf %11, %16 : vector<16x32xf32>
      %18 = arith.mulf %17, %17 : vector<16x32xf32>
      %cst_12 = arith.constant dense<0.000000e+00> : vector<16xf32>
      %19 = vector.multi_reduction <add>, %18, %cst_12 [1] : vector<16x32xf32> to vector<16xf32>
      %20 = vector.shape_cast %19 : vector<16xf32> to vector<16x1xf32>
      %cst_13 = arith.constant 3.200000e+01 : f32
      %21 = vector.broadcast %cst_13 : f32 to vector<16x1xf32>
      %22 = arith.divf %20, %21 : vector<16x1xf32>
      %23 = vector.broadcast %15 : vector<16x1xf32> to vector<16x32xf32>
      %24 = arith.subf %11, %23 : vector<16x32xf32>
      %cst_14 = arith.constant 9.99999974E-6 : f32
      %25 = vector.broadcast %cst_14 : f32 to vector<16x1xf32>
      %26 = arith.addf %22, %25 : vector<16x1xf32>
      %27 = math.rsqrt %26 : vector<16x1xf32>
      %28 = vector.broadcast %27 : vector<16x1xf32> to vector<16x32xf32>
      %29 = arith.mulf %24, %28 : vector<16x32xf32>
      %c0_15 = arith.constant 0 : index
      %c0_16 = arith.constant 0 : index
      %30 = vector.load %arg3[%c0_15, %c0_16] : memref<1x32xf32, #tpu.memory_space<vmem>>, vector<1x32xf32>
      %31 = vector.broadcast %30 : vector<1x32xf32> to vector<16x32xf32>
      %32 = arith.mulf %29, %31 : vector<16x32xf32>
      %c0_17 = arith.constant 0 : index
      %c0_18 = arith.constant 0 : index
      %33 = vector.load %arg4[%c0_17, %c0_18] : memref<1x32xf32, #tpu.memory_space<vmem>>, vector<1x32xf32>
      %34 = vector.broadcast %33 : vector<1x32xf32> to vector<16x32xf32>
      %35 = arith.addf %32, %34 : vector<16x32xf32>
      %36 = arith.truncf %35 : vector<16x32xf32> to vector<16x32xbf16>
      %c0_19 = arith.constant 0 : index
      %c0_20 = arith.constant 0 : index
      %37 = vector.load %arg8[%c0_19, %c0_20] : memref<16x32xbf16, #tpu.memory_space<vmem>>, vector<16x32xbf16>
      tpu.vector_store %arg8[%c0_19, %c0_20], %36 {strides = array<i32>} : memref<16x32xbf16, #tpu.memory_space<vmem>>, vector<16x32xbf16>,
    } else {
    }
    %c0 = arith.constant 0 : index
    %c0_1 = arith.constant 0 : index
    %3 = vector.load %arg8[%c0, %c0_1] : memref<16x32xbf16, #tpu.memory_space<vmem>>, vector<16x32xbf16>
    %c0_2 = arith.constant 0 : index
    %c0_3 = arith.constant 0 : index
    %4 = vector.load %arg5[%c0_2, %c0_3] : memref<32x96xbf16, #tpu.memory_space<vmem>>, vector<32x96xbf16>
    %cst = arith.constant dense<0.000000e+00> : vector<16x96xf32>
    %5 = tpu.matmul %3, %4, %cst {dimension_numbers = #tpu.dot_dimension_numbers<[1], [0], [0], [1], [0, 0, 1, 1], [], []>} : vector<16x32xbf16>, vector<32x96xbf16>, vector<16x96xf32> -> vector<16x96xf32>
    %c0_4 = arith.constant 0 : index
    %c0_5 = arith.constant 0 : index
    %6 = vector.load %arg6[%c0_4, %c0_5] : memref<1x96xf32, #tpu.memory_space<vmem>>, vector<1x96xf32>
    %7 = vector.broadcast %6 : vector<1x96xf32> to vector<16x96xf32>
    %8 = arith.addf %5, %7 : vector<16x96xf32>
    %9 = arith.truncf %8 : vector<16x96xf32> to vector<16x96xbf16>
    %c0_6 = arith.constant 0 : index
    %c0_7 = arith.constant 0 : index
    %10 = vector.load %arg7[%c0_6, %c0_7] : memref<16x96xbf16, #tpu.memory_space<vmem>>, vector<16x96xbf16>
    tpu.vector_store %arg7[%c0_6, %c0_7], %9 {strides = array<i32>} : memref<16x96xbf16, #tpu.memory_space<vmem>>, vector<16x96xbf16>,
    return
  }
  func.func @transform_0(%arg0: i32, %arg1: i32) -> (i32, i32) {
    %c0_i32 = arith.constant 0 : i32
    %c0_i32_0 = arith.constant 0 : i32
    return %arg0, %c0_i32 : i32, i32
  }
  func.func @transform_1(%arg0: i32, %arg1: i32) -> (i32, i32) {
    %c0_i32 = arith.constant 0 : i32
    %c0_i32_0 = arith.constant 0 : i32
    %c0_i32_1 = arith.constant 0 : i32
    return %c0_i32, %c0_i32_0 : i32, i32
  }
  func.func @transform_2(%arg0: i32, %arg1: i32) -> (i32, i32) {
    %c0_i32 = arith.constant 0 : i32
    %c0_i32_0 = arith.constant 0 : i32
    %c0_i32_1 = arith.constant 0 : i32
    return %c0_i32, %c0_i32_0 : i32, i32
  }
  func.func @transform_3(%arg0: i32, %arg1: i32) -> (i32, i32) {
    %c0_i32 = arith.constant 0 : i32
    %c0_i32_0 = arith.constant 0 : i32
    return %c0_i32, %arg1 : i32, i32
  }
  func.func @transform_4(%arg0: i32, %arg1: i32) -> (i32, i32) {
    %c0_i32 = arith.constant 0 : i32
    %c0_i32_0 = arith.constant 0 : i32
    return %c0_i32, %arg1 : i32, i32
  }
  func.func @transform_5(%arg0: i32, %arg1: i32) -> (i32, i32) {
    %c0_i32 = arith.constant 0 : i32
    return %arg0, %arg1 : i32, i32
  }
}

module attributes {stable_mosaic.version = 11 : i64} {
  func.func @_mha_outproj_kernel(%arg0: i32, %arg1: i32, %arg2: memref<1x8x96xbf16, #tpu.memory_space<vmem>>, %arg3: memref<32x32xbf16, #tpu.memory_space<vmem>>, %arg4: memref<1x32xf32, #tpu.memory_space<vmem>>, %arg5: memref<1x8x32xf32, #tpu.memory_space<vmem>>, %arg6: memref<1x8x32xf32, #tpu.memory_space<vmem>>, %arg7: memref<8x32xf32, #tpu.memory_space<vmem>>) attributes {dimension_semantics = [#tpu.dimension_semantics<parallel>, #tpu.dimension_semantics<parallel>], iteration_bounds = array<i64: 2, 1>, scalar_prefetch = 0 : i64, scratch_operands = 1 : i64, tpu.core_type = #tpu.core_type<tc>, window_params = [{transform_indices = @transform_0, window_bounds = array<i64: 1, 8, 96>}, {pipeline_mode = #tpu.pipeline_mode<synchronous>, transform_indices = @transform_1, window_bounds = array<i64: 32, 32>}, {pipeline_mode = #tpu.pipeline_mode<synchronous>, transform_indices = @transform_2, window_bounds = array<i64: 1, 32>}, {transform_indices = @transform_3, window_bounds = array<i64: 1, 8, 32>}, {transform_indices = @transform_4, window_bounds = array<i64: 1, 8, 32>}]} {
    %c8_i32 = arith.constant 8 : i32
    %0 = arith.muli %arg1, %c8_i32 : i32
    %1 = tpu.assume_multiple %0, 8 : i32
    %cst = arith.constant 0.000000e+00 : f32
    %2 = vector.broadcast %cst : f32 to vector<8x32xf32>
    %c0 = arith.constant 0 : index
    %c0_0 = arith.constant 0 : index
    %3 = vector.load %arg7[%c0, %c0_0] : memref<8x32xf32, #tpu.memory_space<vmem>>, vector<8x32xf32>
    tpu.vector_store %arg7[%c0, %c0_0], %2 {strides = array<i32>} : memref<8x32xf32, #tpu.memory_space<vmem>>, vector<8x32xf32>,
    %c0_1 = arith.constant 0 : index
    %4 = arith.index_cast %1 : i32 to index
    %c0_2 = arith.constant 0 : index
    %5 = vector.load %arg2[%c0_1, %4, %c0_2] : memref<1x8x96xbf16, #tpu.memory_space<vmem>>, vector<1x8x8xbf16>
    %6 = vector.shape_cast %5 : vector<1x8x8xbf16> to vector<8x8xbf16>
    %c0_3 = arith.constant 0 : index
    %c0_4 = arith.constant 0 : index
    %c32 = arith.constant 32 : index
    %7 = vector.load %arg2[%c0_3, %c0_4, %c32] : memref<1x8x96xbf16, #tpu.memory_space<vmem>>, vector<1x8x8xbf16>
    %8 = vector.shape_cast %7 : vector<1x8x8xbf16> to vector<8x8xbf16>
    %c0_5 = arith.constant 0 : index
    %c0_6 = arith.constant 0 : index
    %c64 = arith.constant 64 : index
    %9 = vector.load %arg2[%c0_5, %c0_6, %c64] : memref<1x8x96xbf16, #tpu.memory_space<vmem>>, vector<1x8x8xbf16>
    %10 = vector.shape_cast %9 : vector<1x8x8xbf16> to vector<8x8xbf16>
    %cst_7 = arith.constant dense<0.000000e+00> : vector<8x8xf32>
    %11 = tpu.matmul %6, %8, %cst_7 {dimension_numbers = #tpu.dot_dimension_numbers<[1], [1], [0], [0], [0, 0, 1, 0], [], []>} : vector<8x8xbf16>, vector<8x8xbf16>, vector<8x8xf32> -> vector<8x8xf32>
    %cst_8 = arith.constant 0.353553385 : f32
    %12 = vector.broadcast %cst_8 : f32 to vector<8x8xf32>
    %13 = arith.mulf %11, %12 : vector<8x8xf32>
    %cst_9 = arith.constant dense<0xFF800000> : vector<8xf32>
    %14 = vector.multi_reduction <maximumf>, %13, %cst_9 [1] : vector<8x8xf32> to vector<8xf32>
    %15 = vector.shape_cast %14 : vector<8xf32> to vector<8x1xf32>
    %16 = vector.broadcast %15 : vector<8x1xf32> to vector<8x8xf32>
    %17 = arith.subf %13, %16 : vector<8x8xf32>
    %18 = math.exp %17 : vector<8x8xf32>
    %cst_10 = arith.constant dense<0.000000e+00> : vector<8xf32>
    %19 = vector.multi_reduction <add>, %18, %cst_10 [1] : vector<8x8xf32> to vector<8xf32>
    %20 = vector.shape_cast %19 : vector<8xf32> to vector<8x1xf32>
    %21 = tpu.reciprocal %20 {approx = true} : vector<8x1xf32> -> vector<8x1xf32>
    %22 = vector.broadcast %21 : vector<8x1xf32> to vector<8x8xf32>
    %23 = arith.mulf %18, %22 : vector<8x8xf32>
    %24 = arith.truncf %23 : vector<8x8xf32> to vector<8x8xbf16>
    %cst_11 = arith.constant dense<0.000000e+00> : vector<8x8xf32>
    %25 = tpu.matmul %24, %10, %cst_11 {dimension_numbers = #tpu.dot_dimension_numbers<[1], [0], [0], [1], [0, 0, 1, 1], [], []>} : vector<8x8xbf16>, vector<8x8xbf16>, vector<8x8xf32> -> vector<8x8xf32>
    %c0_12 = arith.constant 0 : index
    %c0_13 = arith.constant 0 : index
    %26 = vector.load %arg7[%c0_12, %c0_13] : memref<8x32xf32, #tpu.memory_space<vmem>>, vector<8x32xf32>
    %27 = arith.truncf %25 : vector<8x8xf32> to vector<8x8xbf16>
    %c0_14 = arith.constant 0 : index
    %c0_15 = arith.constant 0 : index
    %28 = vector.load %arg3[%c0_14, %c0_15] : memref<32x32xbf16, #tpu.memory_space<vmem>>, vector<8x32xbf16>
    %cst_16 = arith.constant dense<0.000000e+00> : vector<8x32xf32>
    %29 = tpu.matmul %27, %28, %cst_16 {dimension_numbers = #tpu.dot_dimension_numbers<[1], [0], [0], [1], [0, 0, 1, 1], [], []>} : vector<8x8xbf16>, vector<8x32xbf16>, vector<8x32xf32> -> vector<8x32xf32>
    %30 = arith.addf %26, %29 : vector<8x32xf32>
    %c0_17 = arith.constant 0 : index
    %c0_18 = arith.constant 0 : index
    %31 = vector.load %arg7[%c0_17, %c0_18] : memref<8x32xf32, #tpu.memory_space<vmem>>, vector<8x32xf32>
    tpu.vector_store %arg7[%c0_17, %c0_18], %30 {strides = array<i32>} : memref<8x32xf32, #tpu.memory_space<vmem>>, vector<8x32xf32>,
    %c0_19 = arith.constant 0 : index
    %32 = arith.index_cast %1 : i32 to index
    %c8 = arith.constant 8 : index
    %33 = vector.load %arg2[%c0_19, %32, %c8] : memref<1x8x96xbf16, #tpu.memory_space<vmem>>, vector<1x8x8xbf16>
    %34 = vector.shape_cast %33 : vector<1x8x8xbf16> to vector<8x8xbf16>
    %c0_20 = arith.constant 0 : index
    %c0_21 = arith.constant 0 : index
    %c40 = arith.constant 40 : index
    %35 = vector.load %arg2[%c0_20, %c0_21, %c40] : memref<1x8x96xbf16, #tpu.memory_space<vmem>>, vector<1x8x8xbf16>
    %36 = vector.shape_cast %35 : vector<1x8x8xbf16> to vector<8x8xbf16>
    %c0_22 = arith.constant 0 : index
    %c0_23 = arith.constant 0 : index
    %c72 = arith.constant 72 : index
    %37 = vector.load %arg2[%c0_22, %c0_23, %c72] : memref<1x8x96xbf16, #tpu.memory_space<vmem>>, vector<1x8x8xbf16>
    %38 = vector.shape_cast %37 : vector<1x8x8xbf16> to vector<8x8xbf16>
    %cst_24 = arith.constant dense<0.000000e+00> : vector<8x8xf32>
    %39 = tpu.matmul %34, %36, %cst_24 {dimension_numbers = #tpu.dot_dimension_numbers<[1], [1], [0], [0], [0, 0, 1, 0], [], []>} : vector<8x8xbf16>, vector<8x8xbf16>, vector<8x8xf32> -> vector<8x8xf32>
    %cst_25 = arith.constant 0.353553385 : f32
    %40 = vector.broadcast %cst_25 : f32 to vector<8x8xf32>
    %41 = arith.mulf %39, %40 : vector<8x8xf32>
    %cst_26 = arith.constant dense<0xFF800000> : vector<8xf32>
    %42 = vector.multi_reduction <maximumf>, %41, %cst_26 [1] : vector<8x8xf32> to vector<8xf32>
    %43 = vector.shape_cast %42 : vector<8xf32> to vector<8x1xf32>
    %44 = vector.broadcast %43 : vector<8x1xf32> to vector<8x8xf32>
    %45 = arith.subf %41, %44 : vector<8x8xf32>
    %46 = math.exp %45 : vector<8x8xf32>
    %cst_27 = arith.constant dense<0.000000e+00> : vector<8xf32>
    %47 = vector.multi_reduction <add>, %46, %cst_27 [1] : vector<8x8xf32> to vector<8xf32>
    %48 = vector.shape_cast %47 : vector<8xf32> to vector<8x1xf32>
    %49 = tpu.reciprocal %48 {approx = true} : vector<8x1xf32> -> vector<8x1xf32>
    %50 = vector.broadcast %49 : vector<8x1xf32> to vector<8x8xf32>
    %51 = arith.mulf %46, %50 : vector<8x8xf32>
    %52 = arith.truncf %51 : vector<8x8xf32> to vector<8x8xbf16>
    %cst_28 = arith.constant dense<0.000000e+00> : vector<8x8xf32>
    %53 = tpu.matmul %52, %38, %cst_28 {dimension_numbers = #tpu.dot_dimension_numbers<[1], [0], [0], [1], [0, 0, 1, 1], [], []>} : vector<8x8xbf16>, vector<8x8xbf16>, vector<8x8xf32> -> vector<8x8xf32>
    %c0_29 = arith.constant 0 : index
    %c0_30 = arith.constant 0 : index
    %54 = vector.load %arg7[%c0_29, %c0_30] : memref<8x32xf32, #tpu.memory_space<vmem>>, vector<8x32xf32>
    %55 = arith.truncf %53 : vector<8x8xf32> to vector<8x8xbf16>
    %c8_31 = arith.constant 8 : index
    %c0_32 = arith.constant 0 : index
    %56 = vector.load %arg3[%c8_31, %c0_32] : memref<32x32xbf16, #tpu.memory_space<vmem>>, vector<8x32xbf16>
    %cst_33 = arith.constant dense<0.000000e+00> : vector<8x32xf32>
    %57 = tpu.matmul %55, %56, %cst_33 {dimension_numbers = #tpu.dot_dimension_numbers<[1], [0], [0], [1], [0, 0, 1, 1], [], []>} : vector<8x8xbf16>, vector<8x32xbf16>, vector<8x32xf32> -> vector<8x32xf32>
    %58 = arith.addf %54, %57 : vector<8x32xf32>
    %c0_34 = arith.constant 0 : index
    %c0_35 = arith.constant 0 : index
    %59 = vector.load %arg7[%c0_34, %c0_35] : memref<8x32xf32, #tpu.memory_space<vmem>>, vector<8x32xf32>
    tpu.vector_store %arg7[%c0_34, %c0_35], %58 {strides = array<i32>} : memref<8x32xf32, #tpu.memory_space<vmem>>, vector<8x32xf32>,
    %c0_36 = arith.constant 0 : index
    %60 = arith.index_cast %1 : i32 to index
    %c16 = arith.constant 16 : index
    %61 = vector.load %arg2[%c0_36, %60, %c16] : memref<1x8x96xbf16, #tpu.memory_space<vmem>>, vector<1x8x8xbf16>
    %62 = vector.shape_cast %61 : vector<1x8x8xbf16> to vector<8x8xbf16>
    %c0_37 = arith.constant 0 : index
    %c0_38 = arith.constant 0 : index
    %c48 = arith.constant 48 : index
    %63 = vector.load %arg2[%c0_37, %c0_38, %c48] : memref<1x8x96xbf16, #tpu.memory_space<vmem>>, vector<1x8x8xbf16>
    %64 = vector.shape_cast %63 : vector<1x8x8xbf16> to vector<8x8xbf16>
    %c0_39 = arith.constant 0 : index
    %c0_40 = arith.constant 0 : index
    %c80 = arith.constant 80 : index
    %65 = vector.load %arg2[%c0_39, %c0_40, %c80] : memref<1x8x96xbf16, #tpu.memory_space<vmem>>, vector<1x8x8xbf16>
    %66 = vector.shape_cast %65 : vector<1x8x8xbf16> to vector<8x8xbf16>
    %cst_41 = arith.constant dense<0.000000e+00> : vector<8x8xf32>
    %67 = tpu.matmul %62, %64, %cst_41 {dimension_numbers = #tpu.dot_dimension_numbers<[1], [1], [0], [0], [0, 0, 1, 0], [], []>} : vector<8x8xbf16>, vector<8x8xbf16>, vector<8x8xf32> -> vector<8x8xf32>
    %cst_42 = arith.constant 0.353553385 : f32
    %68 = vector.broadcast %cst_42 : f32 to vector<8x8xf32>
    %69 = arith.mulf %67, %68 : vector<8x8xf32>
    %cst_43 = arith.constant dense<0xFF800000> : vector<8xf32>
    %70 = vector.multi_reduction <maximumf>, %69, %cst_43 [1] : vector<8x8xf32> to vector<8xf32>
    %71 = vector.shape_cast %70 : vector<8xf32> to vector<8x1xf32>
    %72 = vector.broadcast %71 : vector<8x1xf32> to vector<8x8xf32>
    %73 = arith.subf %69, %72 : vector<8x8xf32>
    %74 = math.exp %73 : vector<8x8xf32>
    %cst_44 = arith.constant dense<0.000000e+00> : vector<8xf32>
    %75 = vector.multi_reduction <add>, %74, %cst_44 [1] : vector<8x8xf32> to vector<8xf32>
    %76 = vector.shape_cast %75 : vector<8xf32> to vector<8x1xf32>
    %77 = tpu.reciprocal %76 {approx = true} : vector<8x1xf32> -> vector<8x1xf32>
    %78 = vector.broadcast %77 : vector<8x1xf32> to vector<8x8xf32>
    %79 = arith.mulf %74, %78 : vector<8x8xf32>
    %80 = arith.truncf %79 : vector<8x8xf32> to vector<8x8xbf16>
    %cst_45 = arith.constant dense<0.000000e+00> : vector<8x8xf32>
    %81 = tpu.matmul %80, %66, %cst_45 {dimension_numbers = #tpu.dot_dimension_numbers<[1], [0], [0], [1], [0, 0, 1, 1], [], []>} : vector<8x8xbf16>, vector<8x8xbf16>, vector<8x8xf32> -> vector<8x8xf32>
    %c0_46 = arith.constant 0 : index
    %c0_47 = arith.constant 0 : index
    %82 = vector.load %arg7[%c0_46, %c0_47] : memref<8x32xf32, #tpu.memory_space<vmem>>, vector<8x32xf32>
    %83 = arith.truncf %81 : vector<8x8xf32> to vector<8x8xbf16>
    %c16_48 = arith.constant 16 : index
    %c0_49 = arith.constant 0 : index
    %84 = vector.load %arg3[%c16_48, %c0_49] : memref<32x32xbf16, #tpu.memory_space<vmem>>, vector<8x32xbf16>
    %cst_50 = arith.constant dense<0.000000e+00> : vector<8x32xf32>
    %85 = tpu.matmul %83, %84, %cst_50 {dimension_numbers = #tpu.dot_dimension_numbers<[1], [0], [0], [1], [0, 0, 1, 1], [], []>} : vector<8x8xbf16>, vector<8x32xbf16>, vector<8x32xf32> -> vector<8x32xf32>
    %86 = arith.addf %82, %85 : vector<8x32xf32>
    %c0_51 = arith.constant 0 : index
    %c0_52 = arith.constant 0 : index
    %87 = vector.load %arg7[%c0_51, %c0_52] : memref<8x32xf32, #tpu.memory_space<vmem>>, vector<8x32xf32>
    tpu.vector_store %arg7[%c0_51, %c0_52], %86 {strides = array<i32>} : memref<8x32xf32, #tpu.memory_space<vmem>>, vector<8x32xf32>,
    %c0_53 = arith.constant 0 : index
    %88 = arith.index_cast %1 : i32 to index
    %c24 = arith.constant 24 : index
    %89 = vector.load %arg2[%c0_53, %88, %c24] : memref<1x8x96xbf16, #tpu.memory_space<vmem>>, vector<1x8x8xbf16>
    %90 = vector.shape_cast %89 : vector<1x8x8xbf16> to vector<8x8xbf16>
    %c0_54 = arith.constant 0 : index
    %c0_55 = arith.constant 0 : index
    %c56 = arith.constant 56 : index
    %91 = vector.load %arg2[%c0_54, %c0_55, %c56] : memref<1x8x96xbf16, #tpu.memory_space<vmem>>, vector<1x8x8xbf16>
    %92 = vector.shape_cast %91 : vector<1x8x8xbf16> to vector<8x8xbf16>
    %c0_56 = arith.constant 0 : index
    %c0_57 = arith.constant 0 : index
    %c88 = arith.constant 88 : index
    %93 = vector.load %arg2[%c0_56, %c0_57, %c88] : memref<1x8x96xbf16, #tpu.memory_space<vmem>>, vector<1x8x8xbf16>
    %94 = vector.shape_cast %93 : vector<1x8x8xbf16> to vector<8x8xbf16>
    %cst_58 = arith.constant dense<0.000000e+00> : vector<8x8xf32>
    %95 = tpu.matmul %90, %92, %cst_58 {dimension_numbers = #tpu.dot_dimension_numbers<[1], [1], [0], [0], [0, 0, 1, 0], [], []>} : vector<8x8xbf16>, vector<8x8xbf16>, vector<8x8xf32> -> vector<8x8xf32>
    %cst_59 = arith.constant 0.353553385 : f32
    %96 = vector.broadcast %cst_59 : f32 to vector<8x8xf32>
    %97 = arith.mulf %95, %96 : vector<8x8xf32>
    %cst_60 = arith.constant dense<0xFF800000> : vector<8xf32>
    %98 = vector.multi_reduction <maximumf>, %97, %cst_60 [1] : vector<8x8xf32> to vector<8xf32>
    %99 = vector.shape_cast %98 : vector<8xf32> to vector<8x1xf32>
    %100 = vector.broadcast %99 : vector<8x1xf32> to vector<8x8xf32>
    %101 = arith.subf %97, %100 : vector<8x8xf32>
    %102 = math.exp %101 : vector<8x8xf32>
    %cst_61 = arith.constant dense<0.000000e+00> : vector<8xf32>
    %103 = vector.multi_reduction <add>, %102, %cst_61 [1] : vector<8x8xf32> to vector<8xf32>
    %104 = vector.shape_cast %103 : vector<8xf32> to vector<8x1xf32>
    %105 = tpu.reciprocal %104 {approx = true} : vector<8x1xf32> -> vector<8x1xf32>
    %106 = vector.broadcast %105 : vector<8x1xf32> to vector<8x8xf32>
    %107 = arith.mulf %102, %106 : vector<8x8xf32>
    %108 = arith.truncf %107 : vector<8x8xf32> to vector<8x8xbf16>
    %cst_62 = arith.constant dense<0.000000e+00> : vector<8x8xf32>
    %109 = tpu.matmul %108, %94, %cst_62 {dimension_numbers = #tpu.dot_dimension_numbers<[1], [0], [0], [1], [0, 0, 1, 1], [], []>} : vector<8x8xbf16>, vector<8x8xbf16>, vector<8x8xf32> -> vector<8x8xf32>
    %c0_63 = arith.constant 0 : index
    %c0_64 = arith.constant 0 : index
    %110 = vector.load %arg7[%c0_63, %c0_64] : memref<8x32xf32, #tpu.memory_space<vmem>>, vector<8x32xf32>
    %111 = arith.truncf %109 : vector<8x8xf32> to vector<8x8xbf16>
    %c24_65 = arith.constant 24 : index
    %c0_66 = arith.constant 0 : index
    %112 = vector.load %arg3[%c24_65, %c0_66] : memref<32x32xbf16, #tpu.memory_space<vmem>>, vector<8x32xbf16>
    %cst_67 = arith.constant dense<0.000000e+00> : vector<8x32xf32>
    %113 = tpu.matmul %111, %112, %cst_67 {dimension_numbers = #tpu.dot_dimension_numbers<[1], [0], [0], [1], [0, 0, 1, 1], [], []>} : vector<8x8xbf16>, vector<8x32xbf16>, vector<8x32xf32> -> vector<8x32xf32>
    %114 = arith.addf %110, %113 : vector<8x32xf32>
    %c0_68 = arith.constant 0 : index
    %c0_69 = arith.constant 0 : index
    %115 = vector.load %arg7[%c0_68, %c0_69] : memref<8x32xf32, #tpu.memory_space<vmem>>, vector<8x32xf32>
    tpu.vector_store %arg7[%c0_68, %c0_69], %114 {strides = array<i32>} : memref<8x32xf32, #tpu.memory_space<vmem>>, vector<8x32xf32>,
    %c0_70 = arith.constant 0 : index
    %c0_71 = arith.constant 0 : index
    %116 = vector.load %arg7[%c0_70, %c0_71] : memref<8x32xf32, #tpu.memory_space<vmem>>, vector<8x32xf32>
    %c0_72 = arith.constant 0 : index
    %c0_73 = arith.constant 0 : index
    %117 = vector.load %arg4[%c0_72, %c0_73] : memref<1x32xf32, #tpu.memory_space<vmem>>, vector<1x32xf32>
    %118 = vector.broadcast %117 : vector<1x32xf32> to vector<8x32xf32>
    %119 = arith.addf %116, %118 : vector<8x32xf32>
    %c0_74 = arith.constant 0 : index
    %c0_75 = arith.constant 0 : index
    %c0_76 = arith.constant 0 : index
    %120 = vector.load %arg5[%c0_74, %c0_75, %c0_76] : memref<1x8x32xf32, #tpu.memory_space<vmem>>, vector<1x8x32xf32>
    %121 = vector.shape_cast %120 : vector<1x8x32xf32> to vector<8x32xf32>
    %122 = arith.addf %119, %121 : vector<8x32xf32>
    %c0_77 = arith.constant 0 : index
    %c0_78 = arith.constant 0 : index
    %c0_79 = arith.constant 0 : index
    %123 = vector.load %arg6[%c0_77, %c0_78, %c0_79] : memref<1x8x32xf32, #tpu.memory_space<vmem>>, vector<1x8x32xf32>
    %124 = vector.shape_cast %123 : vector<1x8x32xf32> to vector<8x32xf32>
    %125 = vector.shape_cast %122 : vector<8x32xf32> to vector<1x8x32xf32>
    tpu.vector_store %arg6[%c0_77, %c0_78, %c0_79], %125 {strides = array<i32>} : memref<1x8x32xf32, #tpu.memory_space<vmem>>, vector<1x8x32xf32>,
    return
  }
  func.func @transform_0(%arg0: i32, %arg1: i32) -> (i32, i32, i32) {
    %c0_i32 = arith.constant 0 : i32
    %c0_i32_0 = arith.constant 0 : i32
    %c0_i32_1 = arith.constant 0 : i32
    return %arg0, %c0_i32, %c0_i32_0 : i32, i32, i32
  }
  func.func @transform_1(%arg0: i32, %arg1: i32) -> (i32, i32) {
    %c0_i32 = arith.constant 0 : i32
    %c0_i32_0 = arith.constant 0 : i32
    %c0_i32_1 = arith.constant 0 : i32
    return %c0_i32, %c0_i32_0 : i32, i32
  }
  func.func @transform_2(%arg0: i32, %arg1: i32) -> (i32, i32) {
    %c0_i32 = arith.constant 0 : i32
    %c0_i32_0 = arith.constant 0 : i32
    %c0_i32_1 = arith.constant 0 : i32
    return %c0_i32, %c0_i32_0 : i32, i32
  }
  func.func @transform_3(%arg0: i32, %arg1: i32) -> (i32, i32, i32) {
    %c0_i32 = arith.constant 0 : i32
    %c0_i32_0 = arith.constant 0 : i32
    return %arg0, %arg1, %c0_i32 : i32, i32, i32
  }
  func.func @transform_4(%arg0: i32, %arg1: i32) -> (i32, i32, i32) {
    %c0_i32 = arith.constant 0 : i32
    %c0_i32_0 = arith.constant 0 : i32
    return %arg0, %arg1, %c0_i32 : i32, i32, i32
  }
}

module attributes {stable_mosaic.version = 11 : i64} {
  func.func @_ln_linear_kernel(%arg0: i32, %arg1: i32, %arg2: memref<16x32xf32, #tpu.memory_space<vmem>>, %arg3: memref<1x32xf32, #tpu.memory_space<vmem>>, %arg4: memref<1x32xf32, #tpu.memory_space<vmem>>, %arg5: memref<32x128xbf16, #tpu.memory_space<vmem>>, %arg6: memref<1x128xf32, #tpu.memory_space<vmem>>, %arg7: memref<16x128xbf16, #tpu.memory_space<vmem>>, %arg8: memref<16x32xbf16, #tpu.memory_space<vmem>>) attributes {dimension_semantics = [#tpu.dimension_semantics<parallel>, #tpu.dimension_semantics<arbitrary>], iteration_bounds = array<i64: 1, 1>, scalar_prefetch = 0 : i64, scratch_operands = 1 : i64, tpu.core_type = #tpu.core_type<tc>, window_params = [{transform_indices = @transform_0, window_bounds = array<i64: 16, 32>}, {pipeline_mode = #tpu.pipeline_mode<synchronous>, transform_indices = @transform_1, window_bounds = array<i64: 1, 32>}, {pipeline_mode = #tpu.pipeline_mode<synchronous>, transform_indices = @transform_2, window_bounds = array<i64: 1, 32>}, {transform_indices = @transform_3, window_bounds = array<i64: 32, 128>}, {transform_indices = @transform_4, window_bounds = array<i64: 1, 128>}, {transform_indices = @transform_5, window_bounds = array<i64: 16, 128>}]} {
    %c0_i32 = arith.constant 0 : i32
    %0 = arith.cmpi eq, %arg1, %c0_i32 : i32
    %1 = arith.extui %0 : i1 to i32
    %c0_i32_0 = arith.constant 0 : i32
    %2 = arith.cmpi ne, %1, %c0_i32_0 : i32
    scf.if %2 {
      %c0_10 = arith.constant 0 : index
      %c0_11 = arith.constant 0 : index
      %19 = vector.load %arg2[%c0_10, %c0_11] : memref<16x32xf32, #tpu.memory_space<vmem>>, vector<16x32xf32>
      %cst_12 = arith.constant dense<0.000000e+00> : vector<16xf32>
      %20 = vector.multi_reduction <add>, %19, %cst_12 [1] : vector<16x32xf32> to vector<16xf32>
      %21 = vector.shape_cast %20 : vector<16xf32> to vector<16x1xf32>
      %cst_13 = arith.constant 3.200000e+01 : f32
      %22 = vector.broadcast %cst_13 : f32 to vector<16x1xf32>
      %23 = arith.divf %21, %22 : vector<16x1xf32>
      %24 = vector.broadcast %23 : vector<16x1xf32> to vector<16x32xf32>
      %25 = arith.subf %19, %24 : vector<16x32xf32>
      %26 = arith.mulf %25, %25 : vector<16x32xf32>
      %cst_14 = arith.constant dense<0.000000e+00> : vector<16xf32>
      %27 = vector.multi_reduction <add>, %26, %cst_14 [1] : vector<16x32xf32> to vector<16xf32>
      %28 = vector.shape_cast %27 : vector<16xf32> to vector<16x1xf32>
      %cst_15 = arith.constant 3.200000e+01 : f32
      %29 = vector.broadcast %cst_15 : f32 to vector<16x1xf32>
      %30 = arith.divf %28, %29 : vector<16x1xf32>
      %31 = vector.broadcast %23 : vector<16x1xf32> to vector<16x32xf32>
      %32 = arith.subf %19, %31 : vector<16x32xf32>
      %cst_16 = arith.constant 9.99999974E-6 : f32
      %33 = vector.broadcast %cst_16 : f32 to vector<16x1xf32>
      %34 = arith.addf %30, %33 : vector<16x1xf32>
      %35 = math.rsqrt %34 : vector<16x1xf32>
      %36 = vector.broadcast %35 : vector<16x1xf32> to vector<16x32xf32>
      %37 = arith.mulf %32, %36 : vector<16x32xf32>
      %c0_17 = arith.constant 0 : index
      %c0_18 = arith.constant 0 : index
      %38 = vector.load %arg3[%c0_17, %c0_18] : memref<1x32xf32, #tpu.memory_space<vmem>>, vector<1x32xf32>
      %39 = vector.broadcast %38 : vector<1x32xf32> to vector<16x32xf32>
      %40 = arith.mulf %37, %39 : vector<16x32xf32>
      %c0_19 = arith.constant 0 : index
      %c0_20 = arith.constant 0 : index
      %41 = vector.load %arg4[%c0_19, %c0_20] : memref<1x32xf32, #tpu.memory_space<vmem>>, vector<1x32xf32>
      %42 = vector.broadcast %41 : vector<1x32xf32> to vector<16x32xf32>
      %43 = arith.addf %40, %42 : vector<16x32xf32>
      %44 = arith.truncf %43 : vector<16x32xf32> to vector<16x32xbf16>
      %c0_21 = arith.constant 0 : index
      %c0_22 = arith.constant 0 : index
      %45 = vector.load %arg8[%c0_21, %c0_22] : memref<16x32xbf16, #tpu.memory_space<vmem>>, vector<16x32xbf16>
      tpu.vector_store %arg8[%c0_21, %c0_22], %44 {strides = array<i32>} : memref<16x32xbf16, #tpu.memory_space<vmem>>, vector<16x32xbf16>,
    } else {
    }
    %c0 = arith.constant 0 : index
    %c0_1 = arith.constant 0 : index
    %3 = vector.load %arg8[%c0, %c0_1] : memref<16x32xbf16, #tpu.memory_space<vmem>>, vector<16x32xbf16>
    %c0_2 = arith.constant 0 : index
    %c0_3 = arith.constant 0 : index
    %4 = vector.load %arg5[%c0_2, %c0_3] : memref<32x128xbf16, #tpu.memory_space<vmem>>, vector<32x128xbf16>
    %cst = arith.constant dense<0.000000e+00> : vector<16x128xf32>
    %5 = tpu.matmul %3, %4, %cst {dimension_numbers = #tpu.dot_dimension_numbers<[1], [0], [0], [1], [0, 0, 1, 1], [], []>} : vector<16x32xbf16>, vector<32x128xbf16>, vector<16x128xf32> -> vector<16x128xf32>
    %c0_4 = arith.constant 0 : index
    %c0_5 = arith.constant 0 : index
    %6 = vector.load %arg6[%c0_4, %c0_5] : memref<1x128xf32, #tpu.memory_space<vmem>>, vector<1x128xf32>
    %7 = vector.broadcast %6 : vector<1x128xf32> to vector<16x128xf32>
    %8 = arith.addf %5, %7 : vector<16x128xf32>
    %cst_6 = arith.constant 1.702000e+00 : f32
    %9 = vector.broadcast %cst_6 : f32 to vector<16x128xf32>
    %10 = arith.mulf %9, %8 : vector<16x128xf32>
    %11 = arith.negf %10 : vector<16x128xf32>
    %12 = math.exp %11 : vector<16x128xf32>
    %cst_7 = arith.constant 1.000000e+00 : f32
    %13 = vector.broadcast %cst_7 : f32 to vector<16x128xf32>
    %14 = arith.addf %13, %12 : vector<16x128xf32>
    %15 = arith.divf %13, %14 : vector<16x128xf32>
    %16 = arith.mulf %8, %15 : vector<16x128xf32>
    %17 = arith.truncf %16 : vector<16x128xf32> to vector<16x128xbf16>
    %c0_8 = arith.constant 0 : index
    %c0_9 = arith.constant 0 : index
    %18 = vector.load %arg7[%c0_8, %c0_9] : memref<16x128xbf16, #tpu.memory_space<vmem>>, vector<16x128xbf16>
    tpu.vector_store %arg7[%c0_8, %c0_9], %17 {strides = array<i32>} : memref<16x128xbf16, #tpu.memory_space<vmem>>, vector<16x128xbf16>,
    return
  }
  func.func @transform_0(%arg0: i32, %arg1: i32) -> (i32, i32) {
    %c0_i32 = arith.constant 0 : i32
    %c0_i32_0 = arith.constant 0 : i32
    return %arg0, %c0_i32 : i32, i32
  }
  func.func @transform_1(%arg0: i32, %arg1: i32) -> (i32, i32) {
    %c0_i32 = arith.constant 0 : i32
    %c0_i32_0 = arith.constant 0 : i32
    %c0_i32_1 = arith.constant 0 : i32
    return %c0_i32, %c0_i32_0 : i32, i32
  }
  func.func @transform_2(%arg0: i32, %arg1: i32) -> (i32, i32) {
    %c0_i32 = arith.constant 0 : i32
    %c0_i32_0 = arith.constant 0 : i32
    %c0_i32_1 = arith.constant 0 : i32
    return %c0_i32, %c0_i32_0 : i32, i32
  }
  func.func @transform_3(%arg0: i32, %arg1: i32) -> (i32, i32) {
    %c0_i32 = arith.constant 0 : i32
    %c0_i32_0 = arith.constant 0 : i32
    return %c0_i32, %arg1 : i32, i32
  }
  func.func @transform_4(%arg0: i32, %arg1: i32) -> (i32, i32) {
    %c0_i32 = arith.constant 0 : i32
    %c0_i32_0 = arith.constant 0 : i32
    return %c0_i32, %arg1 : i32, i32
  }
  func.func @transform_5(%arg0: i32, %arg1: i32) -> (i32, i32) {
    %c0_i32 = arith.constant 0 : i32
    return %arg0, %arg1 : i32, i32
  }
}

module attributes {stable_mosaic.version = 11 : i64} {
  func.func @_linear_residual_kernel(%arg0: i32, %arg1: i32, %arg2: i32, %arg3: memref<16x128xbf16, #tpu.memory_space<vmem>>, %arg4: memref<128x32xbf16, #tpu.memory_space<vmem>>, %arg5: memref<1x32xf32, #tpu.memory_space<vmem>>, %arg6: memref<16x32xf32, #tpu.memory_space<vmem>>, %arg7: memref<16x32xf32, #tpu.memory_space<vmem>>, %arg8: memref<16x32xf32, #tpu.memory_space<vmem>>) attributes {dimension_semantics = [#tpu.dimension_semantics<parallel>, #tpu.dimension_semantics<parallel>, #tpu.dimension_semantics<arbitrary>], iteration_bounds = array<i64: 1, 1, 1>, scalar_prefetch = 0 : i64, scratch_operands = 1 : i64, tpu.core_type = #tpu.core_type<tc>, window_params = [{transform_indices = @transform_0, window_bounds = array<i64: 16, 128>}, {transform_indices = @transform_1, window_bounds = array<i64: 128, 32>}, {transform_indices = @transform_2, window_bounds = array<i64: 1, 32>}, {transform_indices = @transform_3, window_bounds = array<i64: 16, 32>}, {transform_indices = @transform_4, window_bounds = array<i64: 16, 32>}]} {
    %c0_i32 = arith.constant 0 : i32
    %0 = arith.cmpi eq, %arg2, %c0_i32 : i32
    %1 = arith.extui %0 : i1 to i32
    %c0_i32_0 = arith.constant 0 : i32
    %2 = arith.cmpi ne, %1, %c0_i32_0 : i32
    scf.if %2 {
      %cst_10 = arith.constant 0.000000e+00 : f32
      %12 = vector.broadcast %cst_10 : f32 to vector<16x32xf32>
      %c0_11 = arith.constant 0 : index
      %c0_12 = arith.constant 0 : index
      %13 = vector.load %arg8[%c0_11, %c0_12] : memref<16x32xf32, #tpu.memory_space<vmem>>, vector<16x32xf32>
      tpu.vector_store %arg8[%c0_11, %c0_12], %12 {strides = array<i32>} : memref<16x32xf32, #tpu.memory_space<vmem>>, vector<16x32xf32>,
    } else {
    }
    %c0 = arith.constant 0 : index
    %c0_1 = arith.constant 0 : index
    %3 = vector.load %arg8[%c0, %c0_1] : memref<16x32xf32, #tpu.memory_space<vmem>>, vector<16x32xf32>
    %c0_2 = arith.constant 0 : index
    %c0_3 = arith.constant 0 : index
    %4 = vector.load %arg3[%c0_2, %c0_3] : memref<16x128xbf16, #tpu.memory_space<vmem>>, vector<16x128xbf16>
    %c0_4 = arith.constant 0 : index
    %c0_5 = arith.constant 0 : index
    %5 = vector.load %arg4[%c0_4, %c0_5] : memref<128x32xbf16, #tpu.memory_space<vmem>>, vector<128x32xbf16>
    %cst = arith.constant dense<0.000000e+00> : vector<16x32xf32>
    %6 = tpu.matmul %4, %5, %cst {dimension_numbers = #tpu.dot_dimension_numbers<[1], [0], [0], [1], [0, 0, 1, 1], [], []>} : vector<16x128xbf16>, vector<128x32xbf16>, vector<16x32xf32> -> vector<16x32xf32>
    %7 = arith.addf %3, %6 : vector<16x32xf32>
    %c0_6 = arith.constant 0 : index
    %c0_7 = arith.constant 0 : index
    %8 = vector.load %arg8[%c0_6, %c0_7] : memref<16x32xf32, #tpu.memory_space<vmem>>, vector<16x32xf32>
    tpu.vector_store %arg8[%c0_6, %c0_7], %7 {strides = array<i32>} : memref<16x32xf32, #tpu.memory_space<vmem>>, vector<16x32xf32>,
    %c0_i32_8 = arith.constant 0 : i32
    %9 = arith.cmpi eq, %arg2, %c0_i32_8 : i32
    %10 = arith.extui %9 : i1 to i32
    %c0_i32_9 = arith.constant 0 : i32
    %11 = arith.cmpi ne, %10, %c0_i32_9 : i32
    scf.if %11 {
      %c0_10 = arith.constant 0 : index
      %c0_11 = arith.constant 0 : index
      %12 = vector.load %arg8[%c0_10, %c0_11] : memref<16x32xf32, #tpu.memory_space<vmem>>, vector<16x32xf32>
      %c0_12 = arith.constant 0 : index
      %c0_13 = arith.constant 0 : index
      %13 = vector.load %arg5[%c0_12, %c0_13] : memref<1x32xf32, #tpu.memory_space<vmem>>, vector<1x32xf32>
      %14 = vector.broadcast %13 : vector<1x32xf32> to vector<16x32xf32>
      %15 = arith.addf %12, %14 : vector<16x32xf32>
      %c0_14 = arith.constant 0 : index
      %c0_15 = arith.constant 0 : index
      %16 = vector.load %arg6[%c0_14, %c0_15] : memref<16x32xf32, #tpu.memory_space<vmem>>, vector<16x32xf32>
      %17 = arith.addf %15, %16 : vector<16x32xf32>
      %c0_16 = arith.constant 0 : index
      %c0_17 = arith.constant 0 : index
      %18 = vector.load %arg7[%c0_16, %c0_17] : memref<16x32xf32, #tpu.memory_space<vmem>>, vector<16x32xf32>
      tpu.vector_store %arg7[%c0_16, %c0_17], %17 {strides = array<i32>} : memref<16x32xf32, #tpu.memory_space<vmem>>, vector<16x32xf32>,
    } else {
    }
    return
  }
  func.func @transform_0(%arg0: i32, %arg1: i32, %arg2: i32) -> (i32, i32) {
    %c0_i32 = arith.constant 0 : i32
    return %arg0, %arg2 : i32, i32
  }
  func.func @transform_1(%arg0: i32, %arg1: i32, %arg2: i32) -> (i32, i32) {
    %c0_i32 = arith.constant 0 : i32
    return %arg2, %arg1 : i32, i32
  }
  func.func @transform_2(%arg0: i32, %arg1: i32, %arg2: i32) -> (i32, i32) {
    %c0_i32 = arith.constant 0 : i32
    %c0_i32_0 = arith.constant 0 : i32
    return %c0_i32, %arg1 : i32, i32
  }
  func.func @transform_3(%arg0: i32, %arg1: i32, %arg2: i32) -> (i32, i32) {
    %c0_i32 = arith.constant 0 : i32
    return %arg0, %arg1 : i32, i32
  }
  func.func @transform_4(%arg0: i32, %arg1: i32, %arg2: i32) -> (i32, i32) {
    %c0_i32 = arith.constant 0 : i32
    return %arg0, %arg1 : i32, i32
  }
}

</mosaic_0001>

<llo_original>
// kernel: transformer_forward.8
$region0: #{transformer_forward.8}
  #allocation0 [shape = 'u32[]', space=smem, size = 0x4, offset = 0x4, fixed_abs, tag = 'smem constant byte address 0x4 - core index']
  #allocation1 [shape = 'u32[144,128]{1,0:T(1,128)}', space=vmem, size = 0x12000, scoped, tag = 'internal scratch']
  #allocation2 [shape = 'bf16[16,32]{1,0:T(16,128)(2,1)}', space=vmem, size = 0x1000, scoped, tag = 'scratch operand']
  %s0 = inlined_call_operand.vmem [shape: f32[16,32], index: 0, kind: input, shape index: {}]
  %s1 = inlined_call_operand.vmem [shape: f32[1,32], index: 1, kind: input, shape index: {}]
  %s2 = inlined_call_operand.vmem [shape: f32[1,32], index: 2, kind: input, shape index: {}]
  %s3 = inlined_call_operand.vmem [shape: bf16[32,96], index: 3, kind: input, shape index: {}]
  %s4 = inlined_call_operand.vmem [shape: f32[1,96], index: 4, kind: input, shape index: {}]
  %s5 = inlined_call_operand.vmem [shape: bf16[16,96], index: 5, kind: output, shape index: {}]
  %s6 = sld [smem:[#allocation0]]
  $region34: #{transformer_forward.8} parent=0
    _
  %s8 = ssub.s32 1, %s6
  %s9 = scalar_select 0, %s8, %s6
  // Predicated region
  $region2: #{transformer_forward.8} parent=0 // pred_check
    _
  $region3: #{transformer_forward.8} parent=0 // pred_check_branch
    %11 = sbr.rel (0) target = $region5
  $region4: #{transformer_forward.8} parent=0 // pred_region
    _
  $region5: #{transformer_forward.8} parent=0 // pred_fallthru
    _
  // Predicated region
  $region6: #{transformer_forward.8} parent=0 // pred_check
    _
  $region7: #{transformer_forward.8} parent=0 // pred_check_branch
    %13 = sbr.rel (0) target = $region9
  $region8: #{transformer_forward.8} parent=0 // pred_region
    _
  $region9: #{transformer_forward.8} parent=0 // pred_fallthru
    _
  // Predicated region
  $region10: #{transformer_forward.8} parent=0 // pred_check
    _
  $region11: #{transformer_forward.8} parent=0 // pred_check_branch
    %15 = sbr.rel (0) target = $region13
  $region12: #{transformer_forward.8} parent=0 // pred_region
    _
  $region13: #{transformer_forward.8} parent=0 // pred_fallthru
    _
  // Predicated region
  $region14: #{transformer_forward.8} parent=0 // pred_check
    _
  $region15: #{transformer_forward.8} parent=0 // pred_check_branch
    %17 = sbr.rel (0) target = $region17
  $region16: #{transformer_forward.8} parent=0 // pred_region
    _
  $region17: #{transformer_forward.8} parent=0 // pred_fallthru
    _
  // Predicated region
  $region18: #{transformer_forward.8} parent=0 // pred_check
    _
  $region19: #{transformer_forward.8} parent=0 // pred_check_branch
    %19 = sbr.rel (0) target = $region21
  $region20: #{transformer_forward.8} parent=0 // pred_region
    _
  $region21: #{transformer_forward.8} parent=0 // pred_fallthru
    _
  %p21 = scmp.eq.s32.totalorder 0, 0
  // Predicated region
  $region22: #{transformer_forward.8} parent=0 // pred_check
    %p22 = pneg %p21
  $region23: #{transformer_forward.8} parent=0 // pred_check_branch
    %24 = sbr.rel (%p22) target = $region25
  $region24: #{transformer_forward.8} parent=0 // pred_region
    %v25 = vld [vmem:[%s0] sm:$0xff]
    %v26 = vld [vmem:[%s0 + $0x8] sm:$0xff]
    %vm27 = vcmask 261120
    %v28 = vsel %vm27, %v25, 0.0
    %29 = vadd.xlane.f32.xlu0 %v28
    %v30 = vpop.xlane.xlu0 %29
    %v31 = vsel %vm27, %v26, 0.0
    %32 = vadd.xlane.f32.xlu0 %v31
    %v33 = vpop.xlane.xlu0 %32
    %v34 = vrcp.pop 32.0
    %v35 = vmul.f32 %v30, %v34
    %v36 = vmul.f32 %v33, %v34
    %v37 = vsub.f32 %v25, %v35
    %v38 = vsub.f32 %v26, %v36
    %v39 = vmul.f32 %v37, %v37
    %v40 = vmul.f32 %v38, %v38
    %v41 = vsel %vm27, %v39, 0.0
    %42 = vadd.xlane.f32.xlu0 %v41
    %v43 = vpop.xlane.xlu0 %42
    %v44 = vsel %vm27, %v40, 0.0
    %45 = vadd.xlane.f32.xlu0 %v44
    %v46 = vpop.xlane.xlu0 %45
    %v47 = vmul.f32 %v43, %v34
    %v48 = vmul.f32 %v46, %v34
    %v49 = vadd.f32 %v47, 1e-05
    %v50 = vadd.f32 %v48, 1e-05
    %v51 = vrsqrt.pop %v49
    %v52 = vrsqrt.pop %v50
    %v53 = vmul.f32 %v37, %v51
    %v54 = vmul.f32 %v38, %v52
    %v55 = vld [vmem:[%s1] sm:$0x1]
    %v57 = vlaneseq
    %v58 = vshrl.u32 %v57, 7
    %v59 = vsub.s32 0, %v58
    %v60 = vrot.slane %v55, %v59
    %v62 = vmul.f32 %v53, %v60
    %v63 = vmul.f32 %v54, %v60
    %v64 = vld [vmem:[%s2] sm:$0x1]
    %v66 = vlaneseq
    %v67 = vshrl.u32 %v66, 7
    %v68 = vsub.s32 0, %v67
    %v69 = vrot.slane %v64, %v68
    %v71 = vadd.f32 %v62, %v69
    %v72 = vadd.f32 %v63, %v69
    %v73 = vpack.c.bf16 %v72, %v71
    %74 = vst.msk [vmem:[#allocation2] sm:$0xff] %vm27, %v73
  $region25: #{transformer_forward.8} parent=0 // pred_fallthru
    _
  %v75 = vld [vmem:[#allocation2] sm:$0xff]
  %v76 = vld [vmem:[%s3] sm:$0xf]
  %v77 = vld [vmem:[%s3 + $0x4] sm:$0xf]
  %v78 = vld [vmem:[%s3 + $0x8] sm:$0xf]
  %v79 = vld [vmem:[%s3 + $0xc] sm:$0xf]
  %v80 = vld [vmem:[%s4] sm:$0x1]
  %v82 = vlaneseq
  %v83 = vshrl.u32 %v82, 7
  %v84 = vsub.s32 0, %v83
  %v85 = vrot.slane %v80, %v84
  %v91 = vunpack.c.l.b16 %v76
  %v92 = vunpack.c.l.b16 %v77
  %v93 = vunpack.c.l.b16 %v78
  %v94 = vunpack.c.l.b16 %v79
  %v95 = vpack.c.b16 %v92, %v91
  %v96 = vpack.c.b16 %v94, %v93
  %vm99 = vcmask 261120
  %v101 = vsel %vm99, %v75, 0
  %103 = vmatprep.subr.bf16.mxu0 0
  %104 = vmatpush1.bf16.msra.mxu0 %v95
  %105 = vmatprep.subr.bf16.mxu0 0
  %106 = vmatpush1.bf16.msra.mxu0 %v96
  %107 = vmatprep.subr.bf16.mxu0 0
  %108 = vmatpush1.bf16.msra.mxu0 0
  %109 = vmatprep.subr.bf16.mxu0 0
  %110 = vmatpush1.bf16.msra.mxu0 0
  %111 = vmatprep.subr.bf16.mxu0 0
  %112 = vmatpush1.bf16.msra.mxu0 0
  %113 = vmatprep.subr.bf16.mxu0 0
  %114 = vmatpush1.bf16.msra.mxu0 0
  %115 = vmatprep.subr.bf16.mxu0 0
  %116 = vmatpush1.bf16.msra.mxu0 0
  %117 = vmatprep.subr.bf16.mxu0 0
  %118 = vmatpush1.bf16.msra.mxu0 0
  %119 = vmatprep.subr.bf16.mxu0 0
  %120 = vmatpush1.bf16.msra.mxu0 0
  %121 = vmatprep.subr.bf16.mxu0 0
  %122 = vmatpush1.bf16.msra.mxu0 0
  %123 = vmatprep.subr.bf16.mxu0 0
  %124 = vmatpush1.bf16.msra.mxu0 0
  %125 = vmatprep.subr.bf16.mxu0 0
  %126 = vmatpush1.bf16.msra.mxu0 0
  %127 = vmatprep.subr.bf16.mxu0 0
  %128 = vmatpush1.bf16.msra.mxu0 0
  %129 = vmatprep.subr.bf16.mxu0 0
  %130 = vmatpush1.bf16.msra.mxu0 0
  %131 = vmatprep.subr.bf16.mxu0 0
  %132 = vmatpush1.bf16.msra.mxu0 0
  %133 = vmatprep.subr.bf16.mxu0 0
  %134 = vmatpush1.bf16.msra.mxu0 0
  %135 = vmatprep.mubr.bf16.mxu0 0
  %136 = vmatmul.mubr.bf16.gmra.mrb[0].mxu0 %v101
  %v137 = vpop.f32.mrb[0].mxu0
  %v138 = vadd.f32 %v85, %v137
  %v139 = vpop.f32.mrb[0].mxu0
  %v140 = vpop.f32.mrb[0].mxu0
  %v141 = vadd.f32 %v85, %v140
  %v142 = vpop.f32.mrb[0].mxu0
  %143 = vdwg.mxu0
  %v144 = vpack.c.bf16 %v141, %v138
  %v146 = vunpack.c.l.b16 %v144
  %v147 = vunpack.c.h.b16 %v144
  %v148 = vpack.c.b16 %v146, %v146
  %v149 = vpack.c.b16 %v147, %v147
  %vm152 = vcmask 781312
  %153 = vst.msk [vmem:[%s5] sm:$0xf] %vm152, %v148
  %154 = vst.msk [vmem:[%s5 + $0x4] sm:$0xf] %vm152, %v149
  // Predicated region
  $region26: #{transformer_forward.8} parent=0 // pred_check
    _
  $region27: #{transformer_forward.8} parent=0 // pred_check_branch
    %156 = sbr.rel (0) target = $region29
  $region28: #{transformer_forward.8} parent=0 // pred_region
    _
  $region29: #{transformer_forward.8} parent=0 // pred_fallthru
    _
  // Predicated region
  $region30: #{transformer_forward.8} parent=0 // pred_check
    _
  $region31: #{transformer_forward.8} parent=0 // pred_check_branch
    %158 = sbr.rel (0) target = $region33
  $region32: #{transformer_forward.8} parent=0 // pred_region
    _
  $region33: #{transformer_forward.8} parent=0 // pred_fallthru
    _

// kernel: transformer_forward.10
$region0: #{transformer_forward.10}
  #allocation0 [shape = 'u32[]', space=smem, size = 0x4, offset = 0x4, fixed_abs, tag = 'smem constant byte address 0x4 - core index']
  #allocation1 [shape = 'u32[144,128]{1,0:T(1,128)}', space=vmem, size = 0x12000, scoped, tag = 'internal scratch']
  #allocation2 [shape = 'bf16[16,32]{1,0:T(16,128)(2,1)}', space=vmem, size = 0x1000, scoped, tag = 'scratch operand']
  %s0 = inlined_call_operand.vmem [shape: f32[16,32], index: 0, kind: input, shape index: {}]
  %s1 = inlined_call_operand.vmem [shape: f32[1,32], index: 1, kind: input, shape index: {}]
  %s2 = inlined_call_operand.vmem [shape: f32[1,32], index: 2, kind: input, shape index: {}]
  %s3 = inlined_call_operand.vmem [shape: bf16[32,128], index: 3, kind: input, shape index: {}]
  %s4 = inlined_call_operand.vmem [shape: f32[1,128], index: 4, kind: input, shape index: {}]
  %s5 = inlined_call_operand.vmem [shape: bf16[16,128], index: 5, kind: output, shape index: {}]
  %s6 = sld [smem:[#allocation0]]
  $region34: #{transformer_forward.10} parent=0
    _
  %s8 = ssub.s32 1, %s6
  %s9 = scalar_select 0, %s8, %s6
  // Predicated region
  $region2: #{transformer_forward.10} parent=0 // pred_check
    _
  $region3: #{transformer_forward.10} parent=0 // pred_check_branch
    %11 = sbr.rel (0) target = $region5
  $region4: #{transformer_forward.10} parent=0 // pred_region
    _
  $region5: #{transformer_forward.10} parent=0 // pred_fallthru
    _
  // Predicated region
  $region6: #{transformer_forward.10} parent=0 // pred_check
    _
  $region7: #{transformer_forward.10} parent=0 // pred_check_branch
    %13 = sbr.rel (0) target = $region9
  $region8: #{transformer_forward.10} parent=0 // pred_region
    _
  $region9: #{transformer_forward.10} parent=0 // pred_fallthru
    _
  // Predicated region
  $region10: #{transformer_forward.10} parent=0 // pred_check
    _
  $region11: #{transformer_forward.10} parent=0 // pred_check_branch
    %15 = sbr.rel (0) target = $region13
  $region12: #{transformer_forward.10} parent=0 // pred_region
    _
  $region13: #{transformer_forward.10} parent=0 // pred_fallthru
    _
  // Predicated region
  $region14: #{transformer_forward.10} parent=0 // pred_check
    _
  $region15: #{transformer_forward.10} parent=0 // pred_check_branch
    %17 = sbr.rel (0) target = $region17
  $region16: #{transformer_forward.10} parent=0 // pred_region
    _
  $region17: #{transformer_forward.10} parent=0 // pred_fallthru
    _
  // Predicated region
  $region18: #{transformer_forward.10} parent=0 // pred_check
    _
  $region19: #{transformer_forward.10} parent=0 // pred_check_branch
    %19 = sbr.rel (0) target = $region21
  $region20: #{transformer_forward.10} parent=0 // pred_region
    _
  $region21: #{transformer_forward.10} parent=0 // pred_fallthru
    _
  %p21 = scmp.eq.s32.totalorder 0, 0
  // Predicated region
  $region22: #{transformer_forward.10} parent=0 // pred_check
    %p22 = pneg %p21
  $region23: #{transformer_forward.10} parent=0 // pred_check_branch
    %24 = sbr.rel (%p22) target = $region25
  $region24: #{transformer_forward.10} parent=0 // pred_region
    %v25 = vld [vmem:[%s0] sm:$0xff]
    %v26 = vld [vmem:[%s0 + $0x8] sm:$0xff]
    %vm27 = vcmask 261120
    %v28 = vsel %vm27, %v25, 0.0
    %29 = vadd.xlane.f32.xlu0 %v28
    %v30 = vpop.xlane.xlu0 %29
    %v31 = vsel %vm27, %v26, 0.0
    %32 = vadd.xlane.f32.xlu0 %v31
    %v33 = vpop.xlane.xlu0 %32
    %v34 = vrcp.pop 32.0
    %v35 = vmul.f32 %v30, %v34
    %v36 = vmul.f32 %v33, %v34
    %v37 = vsub.f32 %v25, %v35
    %v38 = vsub.f32 %v26, %v36
    %v39 = vmul.f32 %v37, %v37
    %v40 = vmul.f32 %v38, %v38
    %v41 = vsel %vm27, %v39, 0.0
    %42 = vadd.xlane.f32.xlu0 %v41
    %v43 = vpop.xlane.xlu0 %42
    %v44 = vsel %vm27, %v40, 0.0
    %45 = vadd.xlane.f32.xlu0 %v44
    %v46 = vpop.xlane.xlu0 %45
    %v47 = vmul.f32 %v43, %v34
    %v48 = vmul.f32 %v46, %v34
    %v49 = vadd.f32 %v47, 1e-05
    %v50 = vadd.f32 %v48, 1e-05
    %v51 = vrsqrt.pop %v49
    %v52 = vrsqrt.pop %v50
    %v53 = vmul.f32 %v37, %v51
    %v54 = vmul.f32 %v38, %v52
    %v55 = vld [vmem:[%s1] sm:$0x1]
    %v57 = vlaneseq
    %v58 = vshrl.u32 %v57, 7
    %v59 = vsub.s32 0, %v58
    %v60 = vrot.slane %v55, %v59
    %v62 = vmul.f32 %v53, %v60
    %v63 = vmul.f32 %v54, %v60
    %v64 = vld [vmem:[%s2] sm:$0x1]
    %v66 = vlaneseq
    %v67 = vshrl.u32 %v66, 7
    %v68 = vsub.s32 0, %v67
    %v69 = vrot.slane %v64, %v68
    %v71 = vadd.f32 %v62, %v69
    %v72 = vadd.f32 %v63, %v69
    %v73 = vpack.c.bf16 %v72, %v71
    %74 = vst.msk [vmem:[#allocation2] sm:$0xff] %vm27, %v73
  $region25: #{transformer_forward.10} parent=0 // pred_fallthru
    _
  %v75 = vld [vmem:[#allocation2] sm:$0xff]
  %v76 = vld [vmem:[%s3] sm:$0xf]
  %v77 = vld [vmem:[%s3 + $0x4] sm:$0xf]
  %v78 = vld [vmem:[%s3 + $0x8] sm:$0xf]
  %v79 = vld [vmem:[%s3 + $0xc] sm:$0xf]
  %v80 = vld [vmem:[%s4] sm:$0x1]
  %v82 = vlaneseq
  %v83 = vshrl.u32 %v82, 7
  %v84 = vsub.s32 0, %v83
  %v85 = vrot.slane %v80, %v84
  %v91 = vunpack.c.l.b16 %v76
  %v92 = vunpack.c.l.b16 %v77
  %v93 = vunpack.c.l.b16 %v78
  %v94 = vunpack.c.l.b16 %v79
  %v95 = vpack.c.b16 %v92, %v91
  %v96 = vpack.c.b16 %v94, %v93
  %vm99 = vcmask 261120
  %v101 = vsel %vm99, %v75, 0
  %103 = vmatprep.subr.bf16.mxu0 0
  %104 = vmatpush1.bf16.msra.mxu0 %v95
  %105 = vmatprep.subr.bf16.mxu0 0
  %106 = vmatpush1.bf16.msra.mxu0 %v96
  %107 = vmatprep.subr.bf16.mxu0 0
  %108 = vmatpush1.bf16.msra.mxu0 0
  %109 = vmatprep.subr.bf16.mxu0 0
  %110 = vmatpush1.bf16.msra.mxu0 0
  %111 = vmatprep.subr.bf16.mxu0 0
  %112 = vmatpush1.bf16.msra.mxu0 0
  %113 = vmatprep.subr.bf16.mxu0 0
  %114 = vmatpush1.bf16.msra.mxu0 0
  %115 = vmatprep.subr.bf16.mxu0 0
  %116 = vmatpush1.bf16.msra.mxu0 0
  %117 = vmatprep.subr.bf16.mxu0 0
  %118 = vmatpush1.bf16.msra.mxu0 0
  %119 = vmatprep.subr.bf16.mxu0 0
  %120 = vmatpush1.bf16.msra.mxu0 0
  %121 = vmatprep.subr.bf16.mxu0 0
  %122 = vmatpush1.bf16.msra.mxu0 0
  %123 = vmatprep.subr.bf16.mxu0 0
  %124 = vmatpush1.bf16.msra.mxu0 0
  %125 = vmatprep.subr.bf16.mxu0 0
  %126 = vmatpush1.bf16.msra.mxu0 0
  %127 = vmatprep.subr.bf16.mxu0 0
  %128 = vmatpush1.bf16.msra.mxu0 0
  %129 = vmatprep.subr.bf16.mxu0 0
  %130 = vmatpush1.bf16.msra.mxu0 0
  %131 = vmatprep.subr.bf16.mxu0 0
  %132 = vmatpush1.bf16.msra.mxu0 0
  %133 = vmatprep.subr.bf16.mxu0 0
  %134 = vmatpush1.bf16.msra.mxu0 0
  %135 = vmatprep.mubr.bf16.mxu0 0
  %136 = vmatmul.mubr.bf16.gmra.mrb[0].mxu0 %v101
  %v137 = vpop.f32.mrb[0].mxu0
  %v138 = vadd.f32 %v85, %v137
  %v139 = vpop.f32.mrb[0].mxu0
  %v140 = vpop.f32.mrb[0].mxu0
  %v141 = vadd.f32 %v85, %v140
  %v142 = vpop.f32.mrb[0].mxu0
  %143 = vdwg.mxu0
  %v144 = vmul.f32 %v138, 1.702
  %v145 = vmul.f32 %v141, 1.702
  %v146 = vxor.u32 %v144, 2147483648
  %v147 = vxor.u32 %v145, 2147483648
  %v148 = vmul.f32 %v146, 1.442695
  %v149 = vpow.pop %v148
  %v150 = vmul.f32 %v147, 1.442695
  %v151 = vpow.pop %v150
  %v152 = vadd.f32 %v149, 1.0
  %v153 = vadd.f32 %v151, 1.0
  %v154 = vrcp.pop %v152
  %v155 = vmul.f32 1.0, %v154
  %v156 = vrcp.pop %v153
  %v157 = vmul.f32 1.0, %v156
  %v158 = vmul.f32 %v138, %v155
  %v159 = vmul.f32 %v141, %v157
  %v160 = vpack.c.bf16 %v159, %v158
  %v162 = vunpack.c.l.b16 %v160
  %v163 = vunpack.c.h.b16 %v160
  %v164 = vpack.c.b16 %v162, %v162
  %v165 = vpack.c.b16 %v163, %v163
  %168 = vst [vmem:[%s5] sm:$0xf] %v164
  %169 = vst [vmem:[%s5 + $0x4] sm:$0xf] %v165
  // Predicated region
  $region26: #{transformer_forward.10} parent=0 // pred_check
    _
  $region27: #{transformer_forward.10} parent=0 // pred_check_branch
    %171 = sbr.rel (0) target = $region29
  $region28: #{transformer_forward.10} parent=0 // pred_region
    _
  $region29: #{transformer_forward.10} parent=0 // pred_fallthru
    _
  // Predicated region
  $region30: #{transformer_forward.10} parent=0 // pred_check
    _
  $region31: #{transformer_forward.10} parent=0 // pred_check_branch
    %173 = sbr.rel (0) target = $region33
  $region32: #{transformer_forward.10} parent=0 // pred_region
    _
  $region33: #{transformer_forward.10} parent=0 // pred_fallthru
    _

// kernel: transformer_forward.9
$region0: #{transformer_forward.9}
  #allocation0 [shape = 'u32[]', space=smem, size = 0x4, offset = 0x4, fixed_abs, tag = 'smem constant byte address 0x4 - core index']
  #allocation1 [shape = 'u32[144,128]{1,0:T(1,128)}', space=vmem, size = 0x12000, scoped, tag = 'internal scratch']
  #allocation2 [shape = 'f32[8,32]{1,0:T(8,128)}', space=vmem, size = 0x1000, scoped, tag = 'scratch operand']
  %s0 = inlined_call_operand.vmem [shape: bf16[2,8,96], index: 0, kind: input, shape index: {}]
  %s1 = inlined_call_operand.vmem [shape: bf16[32,32], index: 1, kind: input, shape index: {}]
  %s2 = inlined_call_operand.vmem [shape: f32[1,32], index: 2, kind: input, shape index: {}]
  %s3 = inlined_call_operand.vmem [shape: f32[2,8,32], index: 3, kind: input, shape index: {}]
  %s4 = inlined_call_operand.vmem [shape: f32[2,8,32], index: 4, kind: output, shape index: {}]
  %s5 = sld [smem:[#allocation0]]
  $region49: #{transformer_forward.9} parent=0
    _
  %s7 = ssub.s32 1, %s5
  %s8 = scalar_select 0, %s7, %s5
  loop: start=0, step=1, limit=4
  $region2: #{transformer_forward.9} parent=0 // loop_pre_header
    _
  $region3: #{transformer_forward.9} parent=0 // loop_header
    %s10 = sphi 0, %s14
    %p11 = scmp.ge.s32.totalorder %s10, 4
    %s17 = sphi 0, %s29
    %s18 = sphi 0, %s25
    %s19 = sphi 0, %s17
    %s20 = sphi 0, %s18
    %s21 = sphi 0, %s19
    %s22 = sphi 0, %s20
    %s32 = sphi 0, %s34
    %s35 = sphi 0, %s32
    %s36 = sphi 0, %s35
    %s52 = sphi 0, %s36
    %s56 = sphi 0, %s56
    %s58 = sphi 0, %s56
    %s59 = sphi 0, %s58
    %s73 = sphi 0, %s59
    %s77 = sphi 0, %s77
    %s79 = sphi 0, %s77
    %s80 = sphi 0, %s79
    %s94 = sphi 0, %s80
    %s102 = sphi 0, %s104
    %s105 = sphi 0, %s102
    %s106 = sphi 0, %s105
    %s122 = sphi 0, %s106
    %s130 = sphi 0, %s132
    %s133 = sphi 0, %s130
    %s134 = sphi 0, %s133
    %s150 = sphi 0, %s134
  $region4: #{transformer_forward.9} parent=0 // loop_header_branch
    %13 = sbr.rel (%p11) target = $region8
  $region5: #{transformer_forward.9} parent=0 // loop_body
    %s15 = ssub.s32 %s10, 1
    %s16 = ssub.s32 %s10, 2
    %s23 = sadd.s32 1, %s18
    %p24 = scmp.ge.s32.totalorder %s23, 1
    %s25 = scalar_select %p24, 0, %s23
    %s26 = sadd.s32 1, %s17
    %s27 = scalar_select %p24, %s26, %s17
    %p28 = scmp.ge.s32.totalorder %s27, 2
    %s29 = scalar_select %p28, 0, %s27
    %s30 = ssub.s32 %s17, %s29
    %p31 = scmp.eq.s32.totalorder %s30, 0
    %s33 = sadd.s32 %s32, 1
    %s34 = scalar_select %p31, %s32, %s33
    %p37 = pneg %p31
    %p38 = scmp.eq.s32.totalorder %s10, 1
    %p39 = por %p37, %p38
    %p40 = scmp.ne.s32.totalorder %s32, %s35
    %p41 = scmp.eq.s32.totalorder %s10, 0
    %p42 = por %p40, %p41
    %p43 = scmp.ne.s32.totalorder %s32, %s35
    %p44 = scmp.eq.s32.totalorder %s15, 1
    %p45 = por %p43, %p44
    %p46 = scmp.ne.s32.totalorder %s35, %s36
    %p47 = scmp.eq.s32.totalorder %s15, 0
    %p48 = por %p46, %p47
    %p49 = scmp.ne.s32.totalorder %s35, %s36
    %p50 = scmp.eq.s32.totalorder %s16, 1
    %p51 = por %p49, %p50
    %p53 = scmp.ne.s32.totalorder %s36, %s52
    %p54 = scmp.eq.s32.totalorder %s16, 0
    %p55 = por %p53, %p54
    %s57 = sadd.s32 %s56, 1
    %p60 = scmp.eq.s32.totalorder %s10, 1
    %p61 = scmp.ne.s32.totalorder %s56, %s58
    %p62 = scmp.eq.s32.totalorder %s10, 0
    %p63 = por %p61, %p62
    %p64 = scmp.ne.s32.totalorder %s56, %s58
    %p65 = scmp.eq.s32.totalorder %s15, 1
    %p66 = por %p64, %p65
    %p67 = scmp.ne.s32.totalorder %s58, %s59
    %p68 = scmp.eq.s32.totalorder %s15, 0
    %p69 = por %p67, %p68
    %p70 = scmp.ne.s32.totalorder %s58, %s59
    %p71 = scmp.eq.s32.totalorder %s16, 1
    %p72 = por %p70, %p71
    %p74 = scmp.ne.s32.totalorder %s59, %s73
    %p75 = scmp.eq.s32.totalorder %s16, 0
    %p76 = por %p74, %p75
    %s78 = sadd.s32 %s77, 1
    %p81 = scmp.eq.s32.totalorder %s10, 1
    %p82 = scmp.ne.s32.totalorder %s77, %s79
    %p83 = scmp.eq.s32.totalorder %s10, 0
    %p84 = por %p82, %p83
    %p85 = scmp.ne.s32.totalorder %s77, %s79
    %p86 = scmp.eq.s32.totalorder %s15, 1
    %p87 = por %p85, %p86
    %p88 = scmp.ne.s32.totalorder %s79, %s80
    %p89 = scmp.eq.s32.totalorder %s15, 0
    %p90 = por %p88, %p89
    %p91 = scmp.ne.s32.totalorder %s79, %s80
    %p92 = scmp.eq.s32.totalorder %s16, 1
    %p93 = por %p91, %p92
    %p95 = scmp.ne.s32.totalorder %s80, %s94
    %p96 = scmp.eq.s32.totalorder %s16, 0
    %p97 = por %p95, %p96
    %s98 = ssub.s32 %s17, %s29
    %s99 = ssub.s32 %s18, %s25
    %s100 = sor.u32 %s98, %s99
    %p101 = scmp.eq.s32.totalorder %s100, 0
    %s103 = sadd.s32 %s102, 1
    %s104 = scalar_select %p101, %s102, %s103
    %p107 = pneg %p101
    %p108 = scmp.eq.s32.totalorder %s10, 1
    %p109 = por %p107, %p108
    %p110 = scmp.ne.s32.totalorder %s102, %s105
    %p111 = scmp.eq.s32.totalorder %s10, 0
    %p112 = por %p110, %p111
    %p113 = scmp.ne.s32.totalorder %s102, %s105
    %p114 = scmp.eq.s32.totalorder %s15, 1
    %p115 = por %p113, %p114
    %p116 = scmp.ne.s32.totalorder %s105, %s106
    %p117 = scmp.eq.s32.totalorder %s15, 0
    %p118 = por %p116, %p117
    %p119 = scmp.ne.s32.totalorder %s105, %s106
    %p120 = scmp.eq.s32.totalorder %s16, 1
    %p121 = por %p119, %p120
    %p123 = scmp.ne.s32.totalorder %s106, %s122
    %p124 = scmp.eq.s32.totalorder %s16, 0
    %p125 = por %p123, %p124
    %s126 = ssub.s32 %s17, %s29
    %s127 = ssub.s32 %s18, %s25
    %s128 = sor.u32 %s126, %s127
    %p129 = scmp.eq.s32.totalorder %s128, 0
    %s131 = sadd.s32 %s130, 1
    %s132 = scalar_select %p129, %s130, %s131
    %p135 = pneg %p129
    %p136 = scmp.eq.s32.totalorder %s10, 1
    %p137 = por %p135, %p136
    %p138 = scmp.ne.s32.totalorder %s130, %s133
    %p139 = scmp.eq.s32.totalorder %s10, 0
    %p140 = por %p138, %p139
    %p141 = scmp.ne.s32.totalorder %s130, %s133
    %p142 = scmp.eq.s32.totalorder %s15, 1
    %p143 = por %p141, %p142
    %p144 = scmp.ne.s32.totalorder %s133, %s134
    %p145 = scmp.eq.s32.totalorder %s15, 0
    %p146 = por %p144, %p145
    %p147 = scmp.ne.s32.totalorder %s133, %s134
    %p148 = scmp.eq.s32.totalorder %s16, 1
    %p149 = por %p147, %p148
    %p151 = scmp.ne.s32.totalorder %s134, %s150
    %p152 = scmp.eq.s32.totalorder %s16, 0
    %p153 = por %p151, %p152
    %p154 = scmp.le.s32.totalorder 1, %s10
    %p155 = scmp.lt.s32.totalorder %s10, 3
    %p156 = pnand %p154, %p155
    %p157 = pneg %p156
    // Predicated region
    $region9: #{transformer_forward.9} parent=5 // pred_check
      _
    $region10: #{transformer_forward.9} parent=5 // pred_check_branch
      %159 = sbr.rel (%p156) target = $region12
    $region11: #{transformer_forward.9} parent=5 // pred_region
      %s160 = ssub.s32 %s10, 1
      // Predicated region
      $region13: #{transformer_forward.9} parent=11 // pred_check
        %p161 = pneg %p69
      $region14: #{transformer_forward.9} parent=11 // pred_check_branch
        %163 = sbr.rel (%p161) target = $region16
      $region15: #{transformer_forward.9} parent=11 // pred_region
        _
      $region16: #{transformer_forward.9} parent=11 // pred_fallthru
        _
      // Predicated region
      $region17: #{transformer_forward.9} parent=11 // pred_check
        %p164 = pneg %p90
      $region18: #{transformer_forward.9} parent=11 // pred_check_branch
        %166 = sbr.rel (%p164) target = $region20
      $region19: #{transformer_forward.9} parent=11 // pred_region
        _
      $region20: #{transformer_forward.9} parent=11 // pred_fallthru
        _
    $region12: #{transformer_forward.9} parent=5 // pred_fallthru
      _
    %p167 = scmp.lt.s32.totalorder %s10, 2
    // Predicated region
    $region21: #{transformer_forward.9} parent=5 // pred_check
      %p168 = pneg %p167
    $region22: #{transformer_forward.9} parent=5 // pred_check_branch
      %170 = sbr.rel (%p168) target = $region24
    $region23: #{transformer_forward.9} parent=5 // pred_region
      // Predicated region
      $region25: #{transformer_forward.9} parent=23 // pred_check
        %p171 = pneg %p42
      $region26: #{transformer_forward.9} parent=23 // pred_check_branch
        %173 = sbr.rel (%p171) target = $region28
      $region27: #{transformer_forward.9} parent=23 // pred_region
        %p174 = scmp.lt.s32.totalorder %s17, 1
        %s175 = scalar_select %p174, %s17, 1
        %s176 = smul.addr %s175, 4
        %s177 = scalar_lea.vmem %s0, %s176
      $region28: #{transformer_forward.9} parent=23 // pred_fallthru
        _
      // Predicated region
      $region29: #{transformer_forward.9} parent=23 // pred_check
        %p178 = pneg %p112
      $region30: #{transformer_forward.9} parent=23 // pred_check_branch
        %180 = sbr.rel (%p178) target = $region32
      $region31: #{transformer_forward.9} parent=23 // pred_region
        %p181 = scmp.lt.s32.totalorder %s17, 1
        %s182 = scalar_select %p181, %s17, 1
        %p183 = scmp.lt.s32.totalorder %s18, 0
        %s184 = scalar_select %p183, %s18, 0
        %s185 = sadd.s32 %s184, %s182
        %s186 = smul.addr %s185, 8
        %s187 = scalar_lea.vmem %s3, %s186
      $region32: #{transformer_forward.9} parent=23 // pred_fallthru
        _
    $region24: #{transformer_forward.9} parent=5 // pred_fallthru
      _
    %p188 = scmp.le.s32.totalorder 1, %s10
    %p189 = scmp.lt.s32.totalorder %s10, 3
    %p190 = pnand %p188, %p189
    %p191 = pneg %p190
    // Predicated region
    $region33: #{transformer_forward.9} parent=5 // pred_check
      _
    $region34: #{transformer_forward.9} parent=5 // pred_check_branch
      %193 = sbr.rel (%p190) target = $region36
    $region35: #{transformer_forward.9} parent=5 // pred_region
      %s194 = ssub.s32 %s10, 1
      %p195 = scmp.lt.s32.totalorder %s19, 1
      %s196 = scalar_select %p195, %s19, 1
      %s197 = smul.addr %s196, 4
      %s198 = scalar_lea.vmem %s0, %s197
      %p199 = pneg %p48
      %p200 = pneg %p45
      %p201 = pneg %p69
      %p202 = pneg %p66
      %p203 = pneg %p90
      %p204 = pneg %p87
      %p205 = scmp.lt.s32.totalorder %s19, 1
      %s206 = scalar_select %p205, %s19, 1
      %p207 = scmp.lt.s32.totalorder %s20, 0
      %s208 = scalar_select %p207, %s20, 0
      %s209 = sadd.s32 %s208, %s206
      %s210 = smul.addr %s209, 8
      %s211 = scalar_lea.vmem %s3, %s210
      %p212 = pneg %p118
      %p213 = pneg %p115
      %p214 = pneg %p146
      %p215 = pneg %p143
      %p216 = scmp.lt.s32.totalorder %s19, 1
      %s217 = scalar_select %p216, %s19, 1
      %p218 = scmp.lt.s32.totalorder %s20, 0
      %s219 = scalar_select %p218, %s20, 0
      %s220 = sadd.s32 %s219, %s217
      %s221 = smul.addr %s220, 8
      %s222 = scalar_lea.vmem %s4, %s221
      %p223 = scmp.lt.s32.totalorder %s19, 1
      %s224 = scalar_select %p223, %s19, 1
      %s225 = smul.addr %s224, 4
      %s226 = scalar_lea.vmem %s0, %s225
      %p227 = scmp.lt.s32.totalorder %s19, 1
      %s228 = scalar_select %p227, %s19, 1
      %p229 = scmp.lt.s32.totalorder %s20, 0
      %s230 = scalar_select %p229, %s20, 0
      %s231 = sadd.s32 %s230, %s228
      %s232 = smul.addr %s231, 8
      %s233 = scalar_lea.vmem %s3, %s232
      %p234 = scmp.lt.s32.totalorder %s19, 1
      %s235 = scalar_select %p234, %s19, 1
      %p236 = scmp.lt.s32.totalorder %s20, 0
      %s237 = scalar_select %p236, %s20, 0
      %s238 = sadd.s32 %s237, %s235
      %s239 = smul.addr %s238, 8
      %s240 = scalar_lea.vmem %s4, %s239
      %s242 = smul.u32 %s20, 8
      %vm243 = vcmask 261120
      %244 = vst.msk [vmem:[#allocation2] sm:$0xff] %vm243, 0.0
      %s245 = sshra.s32 %s242, 3
      %s246 = sand.u32 %s242, 7
      %s247 = smul.addr %s245, 4
      %s248 = scalar_lea.vmem %s226, %s247
      %v249 = vld [vmem:[%s248] sm:$0xf]
      %v250 = vld [vmem:[%s226] sm:$0xf]
      %v252 = vunpack.c.l.b16 %v250
      %v253 = vpack.c.b16 %v252, %v252
      %254 = vrot.lane.b32.xlu0 %v253, 96
      %v255 = vpop.permute.xlu0 %254
      %vm256 = vcmask 64512
      %v258 = vsel %vm256, %v249, 0
      %v261 = vsel %vm256, %v255, 0
      %263 = vmatprep.subr.bf16.mxu0 0
      %264 = vmatpush1.bf16.xpose.msra.mxu0 %v261
      %265 = vmatprep.subr.bf16.mxu0 0
      %266 = vmatpush1.bf16.xpose.msra.mxu0 0
      %267 = vmatprep.subr.bf16.mxu0 0
      %268 = vmatpush1.bf16.xpose.msra.mxu0 0
      %269 = vmatprep.subr.bf16.mxu0 0
      %270 = vmatpush1.bf16.xpose.msra.mxu0 0
      %271 = vmatprep.subr.bf16.mxu0 0
      %272 = vmatpush1.bf16.xpose.msra.mxu0 0
      %273 = vmatprep.subr.bf16.mxu0 0
      %274 = vmatpush1.bf16.xpose.msra.mxu0 0
      %275 = vmatprep.subr.bf16.mxu0 0
      %276 = vmatpush1.bf16.xpose.msra.mxu0 0
      %277 = vmatprep.subr.bf16.mxu0 0
      %278 = vmatpush1.bf16.xpose.msra.mxu0 0
      %279 = vmatprep.subr.bf16.mxu0 0
      %280 = vmatpush1.bf16.xpose.msra.mxu0 0
      %281 = vmatprep.subr.bf16.mxu0 0
      %282 = vmatpush1.bf16.xpose.msra.mxu0 0
      %283 = vmatprep.subr.bf16.mxu0 0
      %284 = vmatpush1.bf16.xpose.msra.mxu0 0
      %285 = vmatprep.subr.bf16.mxu0 0
      %286 = vmatpush1.bf16.xpose.msra.mxu0 0
      %287 = vmatprep.subr.bf16.mxu0 0
      %288 = vmatpush1.bf16.xpose.msra.mxu0 0
      %289 = vmatprep.subr.bf16.mxu0 0
      %290 = vmatpush1.bf16.xpose.msra.mxu0 0
      %291 = vmatprep.subr.bf16.mxu0 0
      %292 = vmatpush1.bf16.xpose.msra.mxu0 0
      %293 = vmatprep.subr.bf16.mxu0 0
      %294 = vmatpush1.bf16.xpose.msra.mxu0 0
      %295 = vmatprep.mubr.bf16.mxu0 0
      %296 = vmatmul.mubr.bf16.gmra.mrb[0].mxu0 %v258
      %v297 = vpop.f32.mrb[0].mxu0
      %v298 = vadd.f32 0.0, %v297
      %v299 = vpop.f32.mrb[0].mxu0
      %v300 = vpop.f32.mrb[0].mxu0
      %v301 = vpop.f32.mrb[0].mxu0
      %302 = vdwg.mxu0
      %v303 = vmul.f32 %v298, 0.35355338
      %v304 = vsel %vm256, %v303, -inf
      %305 = vmax.xlane.f32.xlu0 %v304
      %v306 = vpop.xlane.xlu0 %305
      %v307 = vsub.f32 %v303, %v306
      %v308 = vmul.f32 %v307, 1.442695
      %v309 = vpow.pop %v308
      %v310 = vsel %vm256, %v309, 0.0
      %311 = vadd.xlane.f32.xlu0 %v310
      %v312 = vpop.xlane.xlu0 %311
      %v313 = vrcp.pop %v312
      %v314 = vmul.f32 %v309, %v313
      %v315 = vpack.c.bf16 %v314, %v314
      %316 = vrot.lane.b32.xlu0 %v253, 64
      %v317 = vpop.permute.xlu0 %316
      %v319 = vsel %vm256, %v315, 0
      %vm321 = vcmask 1043456
      %v323 = vsel %vm321, %v317, 0
      %325 = vmatprep.subr.bf16.mxu0 0
      %326 = vmatpush1.bf16.msra.mxu0 %v323
      %327 = vmatprep.subr.bf16.mxu0 0
      %328 = vmatpush1.bf16.msra.mxu0 0
      %329 = vmatprep.subr.bf16.mxu0 0
      %330 = vmatpush1.bf16.msra.mxu0 0
      %331 = vmatprep.subr.bf16.mxu0 0
      %332 = vmatpush1.bf16.msra.mxu0 0
      %333 = vmatprep.subr.bf16.mxu0 0
      %334 = vmatpush1.bf16.msra.mxu0 0
      %335 = vmatprep.subr.bf16.mxu0 0
      %336 = vmatpush1.bf16.msra.mxu0 0
      %337 = vmatprep.subr.bf16.mxu0 0
      %338 = vmatpush1.bf16.msra.mxu0 0
      %339 = vmatprep.subr.bf16.mxu0 0
      %340 = vmatpush1.bf16.msra.mxu0 0
      %341 = vmatprep.subr.bf16.mxu0 0
      %342 = vmatpush1.bf16.msra.mxu0 0
      %343 = vmatprep.subr.bf16.mxu0 0
      %344 = vmatpush1.bf16.msra.mxu0 0
      %345 = vmatprep.subr.bf16.mxu0 0
      %346 = vmatpush1.bf16.msra.mxu0 0
      %347 = vmatprep.subr.bf16.mxu0 0
      %348 = vmatpush1.bf16.msra.mxu0 0
      %349 = vmatprep.subr.bf16.mxu0 0
      %350 = vmatpush1.bf16.msra.mxu0 0
      %351 = vmatprep.subr.bf16.mxu0 0
      %352 = vmatpush1.bf16.msra.mxu0 0
      %353 = vmatprep.subr.bf16.mxu0 0
      %354 = vmatpush1.bf16.msra.mxu0 0
      %355 = vmatprep.subr.bf16.mxu0 0
      %356 = vmatpush1.bf16.msra.mxu0 0
      %357 = vmatprep.mubr.bf16.mxu0 0
      %358 = vmatmul.mubr.bf16.gmra.mrb[0].mxu0 %v319
      %v359 = vpop.f32.mrb[0].mxu0
      %v360 = vadd.f32 0.0, %v359
      %v361 = vpop.f32.mrb[0].mxu0
      %v362 = vpop.f32.mrb[0].mxu0
      %v363 = vpop.f32.mrb[0].mxu0
      %364 = vdwg.mxu0
      %v365 = vld [vmem:[#allocation2] sm:$0xff]
      %v366 = vpack.c.bf16 %v360, %v360
      %v367 = vld [vmem:[%s1] sm:$0xf]
      %v369 = vsel %vm256, %v366, 0
      %v372 = vsel %vm321, %v367, 0
      %374 = vmatprep.subr.bf16.mxu0 0
      %375 = vmatpush1.bf16.msra.mxu0 %v372
      %376 = vmatprep.subr.bf16.mxu0 0
      %377 = vmatpush1.bf16.msra.mxu0 0
      %378 = vmatprep.subr.bf16.mxu0 0
      %379 = vmatpush1.bf16.msra.mxu0 0
      %380 = vmatprep.subr.bf16.mxu0 0
      %381 = vmatpush1.bf16.msra.mxu0 0
      %382 = vmatprep.subr.bf16.mxu0 0
      %383 = vmatpush1.bf16.msra.mxu0 0
      %384 = vmatprep.subr.bf16.mxu0 0
      %385 = vmatpush1.bf16.msra.mxu0 0
      %386 = vmatprep.subr.bf16.mxu0 0
      %387 = vmatpush1.bf16.msra.mxu0 0
      %388 = vmatprep.subr.bf16.mxu0 0
      %389 = vmatpush1.bf16.msra.mxu0 0
      %390 = vmatprep.subr.bf16.mxu0 0
      %391 = vmatpush1.bf16.msra.mxu0 0
      %392 = vmatprep.subr.bf16.mxu0 0
      %393 = vmatpush1.bf16.msra.mxu0 0
      %394 = vmatprep.subr.bf16.mxu0 0
      %395 = vmatpush1.bf16.msra.mxu0 0
      %396 = vmatprep.subr.bf16.mxu0 0
      %397 = vmatpush1.bf16.msra.mxu0 0
      %398 = vmatprep.subr.bf16.mxu0 0
      %399 = vmatpush1.bf16.msra.mxu0 0
      %400 = vmatprep.subr.bf16.mxu0 0
      %401 = vmatpush1.bf16.msra.mxu0 0
      %402 = vmatprep.subr.bf16.mxu0 0
      %403 = vmatpush1.bf16.msra.mxu0 0
      %404 = vmatprep.subr.bf16.mxu0 0
      %405 = vmatpush1.bf16.msra.mxu0 0
      %406 = vmatprep.mubr.bf16.mxu0 0
      %407 = vmatmul.mubr.bf16.gmra.mrb[0].mxu0 %v369
      %v408 = vpop.f32.mrb[0].mxu0
      %v409 = vadd.f32 0.0, %v408
      %v410 = vpop.f32.mrb[0].mxu0
      %v411 = vpop.f32.mrb[0].mxu0
      %v412 = vpop.f32.mrb[0].mxu0
      %413 = vdwg.mxu0
      %v414 = vadd.f32 %v365, %v409
      %415 = vst.msk [vmem:[#allocation2] sm:$0xff] %vm243, %v414
      %v416 = vld [vmem:[%s248] sm:$0xf]
      %v417 = vld [vmem:[%s226] sm:$0xf]
      %v419 = vunpack.c.l.b16 %v416
      %v420 = vpack.c.b16 %v419, %v419
      %421 = vrot.lane.b32.xlu0 %v420, 120
      %v422 = vpop.permute.xlu0 %421
      %v424 = vunpack.c.l.b16 %v417
      %v425 = vpack.c.b16 %v424, %v424
      %426 = vrot.lane.b32.xlu0 %v425, 88
      %v427 = vpop.permute.xlu0 %426
      %v429 = vsel %vm256, %v422, 0
      %v432 = vsel %vm256, %v427, 0
      %434 = vmatprep.subr.bf16.mxu0 0
      %435 = vmatpush1.bf16.xpose.msra.mxu0 %v432
      %436 = vmatprep.subr.bf16.mxu0 0
      %437 = vmatpush1.bf16.xpose.msra.mxu0 0
      %438 = vmatprep.subr.bf16.mxu0 0
      %439 = vmatpush1.bf16.xpose.msra.mxu0 0
      %440 = vmatprep.subr.bf16.mxu0 0
      %441 = vmatpush1.bf16.xpose.msra.mxu0 0
      %442 = vmatprep.subr.bf16.mxu0 0
      %443 = vmatpush1.bf16.xpose.msra.mxu0 0
      %444 = vmatprep.subr.bf16.mxu0 0
      %445 = vmatpush1.bf16.xpose.msra.mxu0 0
      %446 = vmatprep.subr.bf16.mxu0 0
      %447 = vmatpush1.bf16.xpose.msra.mxu0 0
      %448 = vmatprep.subr.bf16.mxu0 0
      %449 = vmatpush1.bf16.xpose.msra.mxu0 0
      %450 = vmatprep.subr.bf16.mxu0 0
      %451 = vmatpush1.bf16.xpose.msra.mxu0 0
      %452 = vmatprep.subr.bf16.mxu0 0
      %453 = vmatpush1.bf16.xpose.msra.mxu0 0
      %454 = vmatprep.subr.bf16.mxu0 0
      %455 = vmatpush1.bf16.xpose.msra.mxu0 0
      %456 = vmatprep.subr.bf16.mxu0 0
      %457 = vmatpush1.bf16.xpose.msra.mxu0 0
      %458 = vmatprep.subr.bf16.mxu0 0
      %459 = vmatpush1.bf16.xpose.msra.mxu0 0
      %460 = vmatprep.subr.bf16.mxu0 0
      %461 = vmatpush1.bf16.xpose.msra.mxu0 0
      %462 = vmatprep.subr.bf16.mxu0 0
      %463 = vmatpush1.bf16.xpose.msra.mxu0 0
      %464 = vmatprep.subr.bf16.mxu0 0
      %465 = vmatpush1.bf16.xpose.msra.mxu0 0
      %466 = vmatprep.mubr.bf16.mxu0 0
      %467 = vmatmul.mubr.bf16.gmra.mrb[0].mxu0 %v429
      %v468 = vpop.f32.mrb[0].mxu0
      %v469 = vadd.f32 0.0, %v468
      %v470 = vpop.f32.mrb[0].mxu0
      %v471 = vpop.f32.mrb[0].mxu0
      %v472 = vpop.f32.mrb[0].mxu0
      %473 = vdwg.mxu0
      %v474 = vmul.f32 %v469, 0.35355338
      %v475 = vsel %vm256, %v474, -inf
      %476 = vmax.xlane.f32.xlu0 %v475
      %v477 = vpop.xlane.xlu0 %476
      %v478 = vsub.f32 %v474, %v477
      %v479 = vmul.f32 %v478, 1.442695
      %v480 = vpow.pop %v479
      %v481 = vsel %vm256, %v480, 0.0
      %482 = vadd.xlane.f32.xlu0 %v481
      %v483 = vpop.xlane.xlu0 %482
      %v484 = vrcp.pop %v483
      %v485 = vmul.f32 %v480, %v484
      %v486 = vpack.c.bf16 %v485, %v485
      %487 = vrot.lane.b32.xlu0 %v425, 56
      %v488 = vpop.permute.xlu0 %487
      %v490 = vsel %vm256, %v486, 0
      %v493 = vsel %vm321, %v488, 0
      %495 = vmatprep.subr.bf16.mxu0 0
      %496 = vmatpush1.bf16.msra.mxu0 %v493
      %497 = vmatprep.subr.bf16.mxu0 0
      %498 = vmatpush1.bf16.msra.mxu0 0
      %499 = vmatprep.subr.bf16.mxu0 0
      %500 = vmatpush1.bf16.msra.mxu0 0
      %501 = vmatprep.subr.bf16.mxu0 0
      %502 = vmatpush1.bf16.msra.mxu0 0
      %503 = vmatprep.subr.bf16.mxu0 0
      %504 = vmatpush1.bf16.msra.mxu0 0
      %505 = vmatprep.subr.bf16.mxu0 0
      %506 = vmatpush1.bf16.msra.mxu0 0
      %507 = vmatprep.subr.bf16.mxu0 0
      %508 = vmatpush1.bf16.msra.mxu0 0
      %509 = vmatprep.subr.bf16.mxu0 0
      %510 = vmatpush1.bf16.msra.mxu0 0
      %511 = vmatprep.subr.bf16.mxu0 0
      %512 = vmatpush1.bf16.msra.mxu0 0
      %513 = vmatprep.subr.bf16.mxu0 0
      %514 = vmatpush1.bf16.msra.mxu0 0
      %515 = vmatprep.subr.bf16.mxu0 0
      %516 = vmatpush1.bf16.msra.mxu0 0
      %517 = vmatprep.subr.bf16.mxu0 0
      %518 = vmatpush1.bf16.msra.mxu0 0
      %519 = vmatprep.subr.bf16.mxu0 0
      %520 = vmatpush1.bf16.msra.mxu0 0
      %521 = vmatprep.subr.bf16.mxu0 0
      %522 = vmatpush1.bf16.msra.mxu0 0
      %523 = vmatprep.subr.bf16.mxu0 0
      %524 = vmatpush1.bf16.msra.mxu0 0
      %525 = vmatprep.subr.bf16.mxu0 0
      %526 = vmatpush1.bf16.msra.mxu0 0
      %527 = vmatprep.mubr.bf16.mxu0 0
      %528 = vmatmul.mubr.bf16.gmra.mrb[0].mxu0 %v490
      %v529 = vpop.f32.mrb[0].mxu0
      %v530 = vadd.f32 0.0, %v529
      %v531 = vpop.f32.mrb[0].mxu0
      %v532 = vpop.f32.mrb[0].mxu0
      %v533 = vpop.f32.mrb[0].mxu0
      %534 = vdwg.mxu0
      %v535 = vld [vmem:[#allocation2] sm:$0xff]
      %v536 = vpack.c.bf16 %v530, %v530
      %v537 = vld [vmem:[%s1 + $0x4] sm:$0xf]
      %v539 = vsel %vm256, %v536, 0
      %v542 = vsel %vm321, %v537, 0
      %544 = vmatprep.subr.bf16.mxu0 0
      %545 = vmatpush1.bf16.msra.mxu0 %v542
      %546 = vmatprep.subr.bf16.mxu0 0
      %547 = vmatpush1.bf16.msra.mxu0 0
      %548 = vmatprep.subr.bf16.mxu0 0
      %549 = vmatpush1.bf16.msra.mxu0 0
      %550 = vmatprep.subr.bf16.mxu0 0
      %551 = vmatpush1.bf16.msra.mxu0 0
      %552 = vmatprep.subr.bf16.mxu0 0
      %553 = vmatpush1.bf16.msra.mxu0 0
      %554 = vmatprep.subr.bf16.mxu0 0
      %555 = vmatpush1.bf16.msra.mxu0 0
      %556 = vmatprep.subr.bf16.mxu0 0
      %557 = vmatpush1.bf16.msra.mxu0 0
      %558 = vmatprep.subr.bf16.mxu0 0
      %559 = vmatpush1.bf16.msra.mxu0 0
      %560 = vmatprep.subr.bf16.mxu0 0
      %561 = vmatpush1.bf16.msra.mxu0 0
      %562 = vmatprep.subr.bf16.mxu0 0
      %563 = vmatpush1.bf16.msra.mxu0 0
      %564 = vmatprep.subr.bf16.mxu0 0
      %565 = vmatpush1.bf16.msra.mxu0 0
      %566 = vmatprep.subr.bf16.mxu0 0
      %567 = vmatpush1.bf16.msra.mxu0 0
      %568 = vmatprep.subr.bf16.mxu0 0
      %569 = vmatpush1.bf16.msra.mxu0 0
      %570 = vmatprep.subr.bf16.mxu0 0
      %571 = vmatpush1.bf16.msra.mxu0 0
      %572 = vmatprep.subr.bf16.mxu0 0
      %573 = vmatpush1.bf16.msra.mxu0 0
      %574 = vmatprep.subr.bf16.mxu0 0
      %575 = vmatpush1.bf16.msra.mxu0 0
      %576 = vmatprep.mubr.bf16.mxu0 0
      %577 = vmatmul.mubr.bf16.gmra.mrb[0].mxu0 %v539
      %v578 = vpop.f32.mrb[0].mxu0
      %v579 = vadd.f32 0.0, %v578
      %v580 = vpop.f32.mrb[0].mxu0
      %v581 = vpop.f32.mrb[0].mxu0
      %v582 = vpop.f32.mrb[0].mxu0
      %583 = vdwg.mxu0
      %v584 = vadd.f32 %v535, %v579
      %585 = vst.msk [vmem:[#allocation2] sm:$0xff] %vm243, %v584
      %v586 = vld [vmem:[%s248] sm:$0xf]
      %v587 = vld [vmem:[%s226] sm:$0xf]
      %v589 = vunpack.c.l.b16 %v586
      %v590 = vpack.c.b16 %v589, %v589
      %591 = vrot.lane.b32.xlu0 %v590, 112
      %v592 = vpop.permute.xlu0 %591
      %v594 = vunpack.c.l.b16 %v587
      %v595 = vpack.c.b16 %v594, %v594
      %596 = vrot.lane.b32.xlu0 %v595, 80
      %v597 = vpop.permute.xlu0 %596
      %v599 = vsel %vm256, %v592, 0
      %v602 = vsel %vm256, %v597, 0
      %604 = vmatprep.subr.bf16.mxu0 0
      %605 = vmatpush1.bf16.xpose.msra.mxu0 %v602
      %606 = vmatprep.subr.bf16.mxu0 0
      %607 = vmatpush1.bf16.xpose.msra.mxu0 0
      %608 = vmatprep.subr.bf16.mxu0 0
      %609 = vmatpush1.bf16.xpose.msra.mxu0 0
      %610 = vmatprep.subr.bf16.mxu0 0
      %611 = vmatpush1.bf16.xpose.msra.mxu0 0
      %612 = vmatprep.subr.bf16.mxu0 0
      %613 = vmatpush1.bf16.xpose.msra.mxu0 0
      %614 = vmatprep.subr.bf16.mxu0 0
      %615 = vmatpush1.bf16.xpose.msra.mxu0 0
      %616 = vmatprep.subr.bf16.mxu0 0
      %617 = vmatpush1.bf16.xpose.msra.mxu0 0
      %618 = vmatprep.subr.bf16.mxu0 0
      %619 = vmatpush1.bf16.xpose.msra.mxu0 0
      %620 = vmatprep.subr.bf16.mxu0 0
      %621 = vmatpush1.bf16.xpose.msra.mxu0 0
      %622 = vmatprep.subr.bf16.mxu0 0
      %623 = vmatpush1.bf16.xpose.msra.mxu0 0
      %624 = vmatprep.subr.bf16.mxu0 0
      %625 = vmatpush1.bf16.xpose.msra.mxu0 0
      %626 = vmatprep.subr.bf16.mxu0 0
      %627 = vmatpush1.bf16.xpose.msra.mxu0 0
      %628 = vmatprep.subr.bf16.mxu0 0
      %629 = vmatpush1.bf16.xpose.msra.mxu0 0
      %630 = vmatprep.subr.bf16.mxu0 0
      %631 = vmatpush1.bf16.xpose.msra.mxu0 0
      %632 = vmatprep.subr.bf16.mxu0 0
      %633 = vmatpush1.bf16.xpose.msra.mxu0 0
      %634 = vmatprep.subr.bf16.mxu0 0
      %635 = vmatpush1.bf16.xpose.msra.mxu0 0
      %636 = vmatprep.mubr.bf16.mxu0 0
      %637 = vmatmul.mubr.bf16.gmra.mrb[0].mxu0 %v599
      %v638 = vpop.f32.mrb[0].mxu0
      %v639 = vadd.f32 0.0, %v638
      %v640 = vpop.f32.mrb[0].mxu0
      %v641 = vpop.f32.mrb[0].mxu0
      %v642 = vpop.f32.mrb[0].mxu0
      %643 = vdwg.mxu0
      %v644 = vmul.f32 %v639, 0.35355338
      %v645 = vsel %vm256, %v644, -inf
      %646 = vmax.xlane.f32.xlu0 %v645
      %v647 = vpop.xlane.xlu0 %646
      %v648 = vsub.f32 %v644, %v647
      %v649 = vmul.f32 %v648, 1.442695
      %v650 = vpow.pop %v649
      %v651 = vsel %vm256, %v650, 0.0
      %652 = vadd.xlane.f32.xlu0 %v651
      %v653 = vpop.xlane.xlu0 %652
      %v654 = vrcp.pop %v653
      %v655 = vmul.f32 %v650, %v654
      %v656 = vpack.c.bf16 %v655, %v655
      %657 = vrot.lane.b32.xlu0 %v595, 48
      %v658 = vpop.permute.xlu0 %657
      %v660 = vsel %vm256, %v656, 0
      %v663 = vsel %vm321, %v658, 0
      %665 = vmatprep.subr.bf16.mxu0 0
      %666 = vmatpush1.bf16.msra.mxu0 %v663
      %667 = vmatprep.subr.bf16.mxu0 0
      %668 = vmatpush1.bf16.msra.mxu0 0
      %669 = vmatprep.subr.bf16.mxu0 0
      %670 = vmatpush1.bf16.msra.mxu0 0
      %671 = vmatprep.subr.bf16.mxu0 0
      %672 = vmatpush1.bf16.msra.mxu0 0
      %673 = vmatprep.subr.bf16.mxu0 0
      %674 = vmatpush1.bf16.msra.mxu0 0
      %675 = vmatprep.subr.bf16.mxu0 0
      %676 = vmatpush1.bf16.msra.mxu0 0
      %677 = vmatprep.subr.bf16.mxu0 0
      %678 = vmatpush1.bf16.msra.mxu0 0
      %679 = vmatprep.subr.bf16.mxu0 0
      %680 = vmatpush1.bf16.msra.mxu0 0
      %681 = vmatprep.subr.bf16.mxu0 0
      %682 = vmatpush1.bf16.msra.mxu0 0
      %683 = vmatprep.subr.bf16.mxu0 0
      %684 = vmatpush1.bf16.msra.mxu0 0
      %685 = vmatprep.subr.bf16.mxu0 0
      %686 = vmatpush1.bf16.msra.mxu0 0
      %687 = vmatprep.subr.bf16.mxu0 0
      %688 = vmatpush1.bf16.msra.mxu0 0
      %689 = vmatprep.subr.bf16.mxu0 0
      %690 = vmatpush1.bf16.msra.mxu0 0
      %691 = vmatprep.subr.bf16.mxu0 0
      %692 = vmatpush1.bf16.msra.mxu0 0
      %693 = vmatprep.subr.bf16.mxu0 0
      %694 = vmatpush1.bf16.msra.mxu0 0
      %695 = vmatprep.subr.bf16.mxu0 0
      %696 = vmatpush1.bf16.msra.mxu0 0
      %697 = vmatprep.mubr.bf16.mxu0 0
      %698 = vmatmul.mubr.bf16.gmra.mrb[0].mxu0 %v660
      %v699 = vpop.f32.mrb[0].mxu0
      %v700 = vadd.f32 0.0, %v699
      %v701 = vpop.f32.mrb[0].mxu0
      %v702 = vpop.f32.mrb[0].mxu0
      %v703 = vpop.f32.mrb[0].mxu0
      %704 = vdwg.mxu0
      %v705 = vld [vmem:[#allocation2] sm:$0xff]
      %v706 = vpack.c.bf16 %v700, %v700
      %v707 = vld [vmem:[%s1 + $0x8] sm:$0xf]
      %v709 = vsel %vm256, %v706, 0
      %v712 = vsel %vm321, %v707, 0
      %714 = vmatprep.subr.bf16.mxu0 0
      %715 = vmatpush1.bf16.msra.mxu0 %v712
      %716 = vmatprep.subr.bf16.mxu0 0
      %717 = vmatpush1.bf16.msra.mxu0 0
      %718 = vmatprep.subr.bf16.mxu0 0
      %719 = vmatpush1.bf16.msra.mxu0 0
      %720 = vmatprep.subr.bf16.mxu0 0
      %721 = vmatpush1.bf16.msra.mxu0 0
      %722 = vmatprep.subr.bf16.mxu0 0
      %723 = vmatpush1.bf16.msra.mxu0 0
      %724 = vmatprep.subr.bf16.mxu0 0
      %725 = vmatpush1.bf16.msra.mxu0 0
      %726 = vmatprep.subr.bf16.mxu0 0
      %727 = vmatpush1.bf16.msra.mxu0 0
      %728 = vmatprep.subr.bf16.mxu0 0
      %729 = vmatpush1.bf16.msra.mxu0 0
      %730 = vmatprep.subr.bf16.mxu0 0
      %731 = vmatpush1.bf16.msra.mxu0 0
      %732 = vmatprep.subr.bf16.mxu0 0
      %733 = vmatpush1.bf16.msra.mxu0 0
      %734 = vmatprep.subr.bf16.mxu0 0
      %735 = vmatpush1.bf16.msra.mxu0 0
      %736 = vmatprep.subr.bf16.mxu0 0
      %737 = vmatpush1.bf16.msra.mxu0 0
      %738 = vmatprep.subr.bf16.mxu0 0
      %739 = vmatpush1.bf16.msra.mxu0 0
      %740 = vmatprep.subr.bf16.mxu0 0
      %741 = vmatpush1.bf16.msra.mxu0 0
      %742 = vmatprep.subr.bf16.mxu0 0
      %743 = vmatpush1.bf16.msra.mxu0 0
      %744 = vmatprep.subr.bf16.mxu0 0
      %745 = vmatpush1.bf16.msra.mxu0 0
      %746 = vmatprep.mubr.bf16.mxu0 0
      %747 = vmatmul.mubr.bf16.gmra.mrb[0].mxu0 %v709
      %v748 = vpop.f32.mrb[0].mxu0
      %v749 = vadd.f32 0.0, %v748
      %v750 = vpop.f32.mrb[0].mxu0
      %v751 = vpop.f32.mrb[0].mxu0
      %v752 = vpop.f32.mrb[0].mxu0
      %753 = vdwg.mxu0
      %v754 = vadd.f32 %v705, %v749
      %755 = vst.msk [vmem:[#allocation2] sm:$0xff] %vm243, %v754
      %v756 = vld [vmem:[%s248] sm:$0xf]
      %v757 = vld [vmem:[%s226] sm:$0xf]
      %v759 = vunpack.c.l.b16 %v756
      %v760 = vpack.c.b16 %v759, %v759
      %761 = vrot.lane.b32.xlu0 %v760, 104
      %v762 = vpop.permute.xlu0 %761
      %v764 = vunpack.c.l.b16 %v757
      %v765 = vpack.c.b16 %v764, %v764
      %766 = vrot.lane.b32.xlu0 %v765, 72
      %v767 = vpop.permute.xlu0 %766
      %v769 = vsel %vm256, %v762, 0
      %v772 = vsel %vm256, %v767, 0
      %774 = vmatprep.subr.bf16.mxu0 0
      %775 = vmatpush1.bf16.xpose.msra.mxu0 %v772
      %776 = vmatprep.subr.bf16.mxu0 0
      %777 = vmatpush1.bf16.xpose.msra.mxu0 0
      %778 = vmatprep.subr.bf16.mxu0 0
      %779 = vmatpush1.bf16.xpose.msra.mxu0 0
      %780 = vmatprep.subr.bf16.mxu0 0
      %781 = vmatpush1.bf16.xpose.msra.mxu0 0
      %782 = vmatprep.subr.bf16.mxu0 0
      %783 = vmatpush1.bf16.xpose.msra.mxu0 0
      %784 = vmatprep.subr.bf16.mxu0 0
      %785 = vmatpush1.bf16.xpose.msra.mxu0 0
      %786 = vmatprep.subr.bf16.mxu0 0
      %787 = vmatpush1.bf16.xpose.msra.mxu0 0
      %788 = vmatprep.subr.bf16.mxu0 0
      %789 = vmatpush1.bf16.xpose.msra.mxu0 0
      %790 = vmatprep.subr.bf16.mxu0 0
      %791 = vmatpush1.bf16.xpose.msra.mxu0 0
      %792 = vmatprep.subr.bf16.mxu0 0
      %793 = vmatpush1.bf16.xpose.msra.mxu0 0
      %794 = vmatprep.subr.bf16.mxu0 0
      %795 = vmatpush1.bf16.xpose.msra.mxu0 0
      %796 = vmatprep.subr.bf16.mxu0 0
      %797 = vmatpush1.bf16.xpose.msra.mxu0 0
      %798 = vmatprep.subr.bf16.mxu0 0
      %799 = vmatpush1.bf16.xpose.msra.mxu0 0
      %800 = vmatprep.subr.bf16.mxu0 0
      %801 = vmatpush1.bf16.xpose.msra.mxu0 0
      %802 = vmatprep.subr.bf16.mxu0 0
      %803 = vmatpush1.bf16.xpose.msra.mxu0 0
      %804 = vmatprep.subr.bf16.mxu0 0
      %805 = vmatpush1.bf16.xpose.msra.mxu0 0
      %806 = vmatprep.mubr.bf16.mxu0 0
      %807 = vmatmul.mubr.bf16.gmra.mrb[0].mxu0 %v769
      %v808 = vpop.f32.mrb[0].mxu0
      %v809 = vadd.f32 0.0, %v808
      %v810 = vpop.f32.mrb[0].mxu0
      %v811 = vpop.f32.mrb[0].mxu0
      %v812 = vpop.f32.mrb[0].mxu0
      %813 = vdwg.mxu0
      %v814 = vmul.f32 %v809, 0.35355338
      %v815 = vsel %vm256, %v814, -inf
      %816 = vmax.xlane.f32.xlu0 %v815
      %v817 = vpop.xlane.xlu0 %816
      %v818 = vsub.f32 %v814, %v817
      %v819 = vmul.f32 %v818, 1.442695
      %v820 = vpow.pop %v819
      %v821 = vsel %vm256, %v820, 0.0
      %822 = vadd.xlane.f32.xlu0 %v821
      %v823 = vpop.xlane.xlu0 %822
      %v824 = vrcp.pop %v823
      %v825 = vmul.f32 %v820, %v824
      %v826 = vpack.c.bf16 %v825, %v825
      %827 = vrot.lane.b32.xlu0 %v765, 40
      %v828 = vpop.permute.xlu0 %827
      %v830 = vsel %vm256, %v826, 0
      %v833 = vsel %vm321, %v828, 0
      %835 = vmatprep.subr.bf16.mxu0 0
      %836 = vmatpush1.bf16.msra.mxu0 %v833
      %837 = vmatprep.subr.bf16.mxu0 0
      %838 = vmatpush1.bf16.msra.mxu0 0
      %839 = vmatprep.subr.bf16.mxu0 0
      %840 = vmatpush1.bf16.msra.mxu0 0
      %841 = vmatprep.subr.bf16.mxu0 0
      %842 = vmatpush1.bf16.msra.mxu0 0
      %843 = vmatprep.subr.bf16.mxu0 0
      %844 = vmatpush1.bf16.msra.mxu0 0
      %845 = vmatprep.subr.bf16.mxu0 0
      %846 = vmatpush1.bf16.msra.mxu0 0
      %847 = vmatprep.subr.bf16.mxu0 0
      %848 = vmatpush1.bf16.msra.mxu0 0
      %849 = vmatprep.subr.bf16.mxu0 0
      %850 = vmatpush1.bf16.msra.mxu0 0
      %851 = vmatprep.subr.bf16.mxu0 0
      %852 = vmatpush1.bf16.msra.mxu0 0
      %853 = vmatprep.subr.bf16.mxu0 0
      %854 = vmatpush1.bf16.msra.mxu0 0
      %855 = vmatprep.subr.bf16.mxu0 0
      %856 = vmatpush1.bf16.msra.mxu0 0
      %857 = vmatprep.subr.bf16.mxu0 0
      %858 = vmatpush1.bf16.msra.mxu0 0
      %859 = vmatprep.subr.bf16.mxu0 0
      %860 = vmatpush1.bf16.msra.mxu0 0
      %861 = vmatprep.subr.bf16.mxu0 0
      %862 = vmatpush1.bf16.msra.mxu0 0
      %863 = vmatprep.subr.bf16.mxu0 0
      %864 = vmatpush1.bf16.msra.mxu0 0
      %865 = vmatprep.subr.bf16.mxu0 0
      %866 = vmatpush1.bf16.msra.mxu0 0
      %867 = vmatprep.mubr.bf16.mxu0 0
      %868 = vmatmul.mubr.bf16.gmra.mrb[0].mxu0 %v830
      %v869 = vpop.f32.mrb[0].mxu0
      %v870 = vadd.f32 0.0, %v869
      %v871 = vpop.f32.mrb[0].mxu0
      %v872 = vpop.f32.mrb[0].mxu0
      %v873 = vpop.f32.mrb[0].mxu0
      %874 = vdwg.mxu0
      %v875 = vld [vmem:[#allocation2] sm:$0xff]
      %v876 = vpack.c.bf16 %v870, %v870
      %v877 = vld [vmem:[%s1 + $0xc] sm:$0xf]
      %v879 = vsel %vm256, %v876, 0
      %v882 = vsel %vm321, %v877, 0
      %884 = vmatprep.subr.bf16.mxu0 0
      %885 = vmatpush1.bf16.msra.mxu0 %v882
      %886 = vmatprep.subr.bf16.mxu0 0
      %887 = vmatpush1.bf16.msra.mxu0 0
      %888 = vmatprep.subr.bf16.mxu0 0
      %889 = vmatpush1.bf16.msra.mxu0 0
      %890 = vmatprep.subr.bf16.mxu0 0
      %891 = vmatpush1.bf16.msra.mxu0 0
      %892 = vmatprep.subr.bf16.mxu0 0
      %893 = vmatpush1.bf16.msra.mxu0 0
      %894 = vmatprep.subr.bf16.mxu0 0
      %895 = vmatpush1.bf16.msra.mxu0 0
      %896 = vmatprep.subr.bf16.mxu0 0
      %897 = vmatpush1.bf16.msra.mxu0 0
      %898 = vmatprep.subr.bf16.mxu0 0
      %899 = vmatpush1.bf16.msra.mxu0 0
      %900 = vmatprep.subr.bf16.mxu0 0
      %901 = vmatpush1.bf16.msra.mxu0 0
      %902 = vmatprep.subr.bf16.mxu0 0
      %903 = vmatpush1.bf16.msra.mxu0 0
      %904 = vmatprep.subr.bf16.mxu0 0
      %905 = vmatpush1.bf16.msra.mxu0 0
      %906 = vmatprep.subr.bf16.mxu0 0
      %907 = vmatpush1.bf16.msra.mxu0 0
      %908 = vmatprep.subr.bf16.mxu0 0
      %909 = vmatpush1.bf16.msra.mxu0 0
      %910 = vmatprep.subr.bf16.mxu0 0
      %911 = vmatpush1.bf16.msra.mxu0 0
      %912 = vmatprep.subr.bf16.mxu0 0
      %913 = vmatpush1.bf16.msra.mxu0 0
      %914 = vmatprep.subr.bf16.mxu0 0
      %915 = vmatpush1.bf16.msra.mxu0 0
      %916 = vmatprep.mubr.bf16.mxu0 0
      %917 = vmatmul.mubr.bf16.gmra.mrb[0].mxu0 %v879
      %v918 = vpop.f32.mrb[0].mxu0
      %v919 = vadd.f32 0.0, %v918
      %v920 = vpop.f32.mrb[0].mxu0
      %v921 = vpop.f32.mrb[0].mxu0
      %v922 = vpop.f32.mrb[0].mxu0
      %923 = vdwg.mxu0
      %v924 = vadd.f32 %v875, %v919
      %925 = vst.msk [vmem:[#allocation2] sm:$0xff] %vm243, %v924
      %v926 = vld [vmem:[#allocation2] sm:$0xff]
      %v927 = vld [vmem:[%s2] sm:$0x1]
      %v929 = vlaneseq
      %v930 = vshrl.u32 %v929, 7
      %v931 = vsub.s32 0, %v930
      %v932 = vrot.slane %v927, %v931
      %v934 = vadd.f32 %v926, %v932
      %v935 = vld [vmem:[%s233] sm:$0xff]
      %v936 = vadd.f32 %v934, %v935
      %937 = vst.msk [vmem:[%s240] sm:$0xff] %vm243, %v936
      %p938 = scmp.lt.s32.totalorder %s19, 1
      %s939 = scalar_select %p938, %s19, 1
      %p940 = scmp.lt.s32.totalorder %s20, 0
      %s941 = scalar_select %p940, %s20, 0
      %s942 = sadd.s32 %s941, %s939
      %s943 = smul.addr %s942, 8
      %s944 = scalar_lea.vmem %s4, %s943
      // Predicated region
      $region37: #{transformer_forward.9} parent=35 // pred_check
        %p945 = pneg %p143
      $region38: #{transformer_forward.9} parent=35 // pred_check_branch
        %947 = sbr.rel (%p945) target = $region40
      $region39: #{transformer_forward.9} parent=35 // pred_region
        _
      $region40: #{transformer_forward.9} parent=35 // pred_fallthru
        _
    $region36: #{transformer_forward.9} parent=5 // pred_fallthru
      _
    %p948 = scmp.le.s32.totalorder 2, %s10
    // Predicated region
    $region41: #{transformer_forward.9} parent=5 // pred_check
      %p949 = pneg %p948
    $region42: #{transformer_forward.9} parent=5 // pred_check_branch
      %951 = sbr.rel (%p949) target = $region44
    $region43: #{transformer_forward.9} parent=5 // pred_region
      %s952 = ssub.s32 %s10, 2
      // Predicated region
      $region45: #{transformer_forward.9} parent=43 // pred_check
        %p953 = pneg %p149
      $region46: #{transformer_forward.9} parent=43 // pred_check_branch
        %955 = sbr.rel (%p953) target = $region48
      $region47: #{transformer_forward.9} parent=43 // pred_region
        %p956 = scmp.lt.s32.totalorder %s21, 1
        %s957 = scalar_select %p956, %s21, 1
        %p958 = scmp.lt.s32.totalorder %s22, 0
        %s959 = scalar_select %p958, %s22, 0
        %s960 = sadd.s32 %s959, %s957
        %s961 = smul.addr %s960, 8
        %s962 = scalar_lea.vmem %s4, %s961
      $region48: #{transformer_forward.9} parent=43 // pred_fallthru
        _
    $region44: #{transformer_forward.9} parent=5 // pred_fallthru
      _
  $region6: #{transformer_forward.9} parent=0 // loop_footer
    %s14 = sadd.s32 1, %s10
  $region7: #{transformer_forward.9} parent=0 // loop_footer_branch
    %9 = sbr.rel target = $region3
  $region8: #{transformer_forward.9} parent=0 // loop_exit
    _

// kernel: transformer_forward.11
$region0: #{transformer_forward.11}
  #allocation0 [shape = 'u32[]', space=smem, size = 0x4, offset = 0x4, fixed_abs, tag = 'smem constant byte address 0x4 - core index']
  #allocation1 [shape = 'u32[144,128]{1,0:T(1,128)}', space=vmem, size = 0x12000, scoped, tag = 'internal scratch']
  #allocation2 [shape = 'f32[16,32]{1,0:T(8,128)}', space=vmem, size = 0x2000, scoped, tag = 'scratch operand']
  %s0 = inlined_call_operand.vmem [shape: bf16[16,128], index: 0, kind: input, shape index: {}]
  %s1 = inlined_call_operand.vmem [shape: bf16[128,32], index: 1, kind: input, shape index: {}]
  %s2 = inlined_call_operand.vmem [shape: f32[1,32], index: 2, kind: input, shape index: {}]
  %s3 = inlined_call_operand.vmem [shape: f32[16,32], index: 3, kind: input, shape index: {}]
  %s4 = inlined_call_operand.vmem [shape: f32[16,32], index: 4, kind: output, shape index: {}]
  %s5 = sld [smem:[#allocation0]]
  $region34: #{transformer_forward.11} parent=0
    _
  %s7 = ssub.s32 1, %s5
  %s8 = scalar_select 0, %s7, %s5
  // Predicated region
  $region2: #{transformer_forward.11} parent=0 // pred_check
    _
  $region3: #{transformer_forward.11} parent=0 // pred_check_branch
    %10 = sbr.rel (0) target = $region5
  $region4: #{transformer_forward.11} parent=0 // pred_region
    _
  $region5: #{transformer_forward.11} parent=0 // pred_fallthru
    _
  // Predicated region
  $region6: #{transformer_forward.11} parent=0 // pred_check
    _
  $region7: #{transformer_forward.11} parent=0 // pred_check_branch
    %12 = sbr.rel (0) target = $region9
  $region8: #{transformer_forward.11} parent=0 // pred_region
    _
  $region9: #{transformer_forward.11} parent=0 // pred_fallthru
    _
  // Predicated region
  $region10: #{transformer_forward.11} parent=0 // pred_check
    _
  $region11: #{transformer_forward.11} parent=0 // pred_check_branch
    %14 = sbr.rel (0) target = $region13
  $region12: #{transformer_forward.11} parent=0 // pred_region
    _
  $region13: #{transformer_forward.11} parent=0 // pred_fallthru
    _
  // Predicated region
  $region14: #{transformer_forward.11} parent=0 // pred_check
    _
  $region15: #{transformer_forward.11} parent=0 // pred_check_branch
    %16 = sbr.rel (0) target = $region17
  $region16: #{transformer_forward.11} parent=0 // pred_region
    _
  $region17: #{transformer_forward.11} parent=0 // pred_fallthru
    _
  %p18 = scmp.eq.s32.totalorder 0, 0
  // Predicated region
  $region18: #{transformer_forward.11} parent=0 // pred_check
    %p19 = pneg %p18
  $region19: #{transformer_forward.11} parent=0 // pred_check_branch
    %21 = sbr.rel (%p19) target = $region21
  $region20: #{transformer_forward.11} parent=0 // pred_region
    %vm22 = vcmask 261120
    %23 = vst.msk [vmem:[#allocation2] sm:$0xff] %vm22, 0.0
    %24 = vst.msk [vmem:[#allocation2 + $0x8] sm:$0xff] %vm22, 0.0
  $region21: #{transformer_forward.11} parent=0 // pred_fallthru
    _
  %v25 = vld [vmem:[#allocation2] sm:$0xff]
  %v26 = vld [vmem:[#allocation2 + $0x8] sm:$0xff]
  %v27 = vld [vmem:[%s0] sm:$0xf]
  %v28 = vld [vmem:[%s0 + $0x4] sm:$0xf]
  %v29 = vld [vmem:[%s1] sm:$0xf]
  %v30 = vld [vmem:[%s1 + $0x4] sm:$0xf]
  %v31 = vld [vmem:[%s1 + $0x8] sm:$0xf]
  %v32 = vld [vmem:[%s1 + $0xc] sm:$0xf]
  %v33 = vld [vmem:[%s1 + $0x10] sm:$0xf]
  %v34 = vld [vmem:[%s1 + $0x14] sm:$0xf]
  %v35 = vld [vmem:[%s1 + $0x18] sm:$0xf]
  %v36 = vld [vmem:[%s1 + $0x1c] sm:$0xf]
  %v37 = vld [vmem:[%s1 + $0x20] sm:$0xf]
  %v38 = vld [vmem:[%s1 + $0x24] sm:$0xf]
  %v39 = vld [vmem:[%s1 + $0x28] sm:$0xf]
  %v40 = vld [vmem:[%s1 + $0x2c] sm:$0xf]
  %v41 = vld [vmem:[%s1 + $0x30] sm:$0xf]
  %v42 = vld [vmem:[%s1 + $0x34] sm:$0xf]
  %v43 = vld [vmem:[%s1 + $0x38] sm:$0xf]
  %v44 = vld [vmem:[%s1 + $0x3c] sm:$0xf]
  %v47 = vunpack.c.l.b16 %v27
  %v48 = vunpack.c.l.b16 %v28
  %v49 = vpack.c.b16 %v48, %v47
  %v67 = vunpack.c.l.b16 %v29
  %v68 = vunpack.c.l.b16 %v30
  %v69 = vunpack.c.l.b16 %v31
  %v70 = vunpack.c.l.b16 %v32
  %v71 = vunpack.c.l.b16 %v33
  %v72 = vunpack.c.l.b16 %v34
  %v73 = vunpack.c.l.b16 %v35
  %v74 = vunpack.c.l.b16 %v36
  %v75 = vunpack.c.l.b16 %v37
  %v76 = vunpack.c.l.b16 %v38
  %v77 = vunpack.c.l.b16 %v39
  %v78 = vunpack.c.l.b16 %v40
  %v79 = vunpack.c.l.b16 %v41
  %v80 = vunpack.c.l.b16 %v42
  %v81 = vunpack.c.l.b16 %v43
  %v82 = vunpack.c.l.b16 %v44
  %v83 = vpack.c.b16 %v68, %v67
  %v84 = vpack.c.b16 %v70, %v69
  %v85 = vpack.c.b16 %v72, %v71
  %v86 = vpack.c.b16 %v74, %v73
  %v87 = vpack.c.b16 %v76, %v75
  %v88 = vpack.c.b16 %v78, %v77
  %v89 = vpack.c.b16 %v80, %v79
  %v90 = vpack.c.b16 %v82, %v81
  %99 = vmatprep.subr.bf16.mxu0 0
  %100 = vmatpush1.bf16.msra.mxu0 %v83
  %101 = vmatprep.subr.bf16.mxu0 0
  %102 = vmatpush1.bf16.msra.mxu0 %v84
  %103 = vmatprep.subr.bf16.mxu0 0
  %104 = vmatpush1.bf16.msra.mxu0 %v85
  %105 = vmatprep.subr.bf16.mxu0 0
  %106 = vmatpush1.bf16.msra.mxu0 %v86
  %107 = vmatprep.subr.bf16.mxu0 0
  %108 = vmatpush1.bf16.msra.mxu0 %v87
  %109 = vmatprep.subr.bf16.mxu0 0
  %110 = vmatpush1.bf16.msra.mxu0 %v88
  %111 = vmatprep.subr.bf16.mxu0 0
  %112 = vmatpush1.bf16.msra.mxu0 %v89
  %113 = vmatprep.subr.bf16.mxu0 0
  %114 = vmatpush1.bf16.msra.mxu0 %v90
  %115 = vmatprep.subr.bf16.mxu0 0
  %116 = vmatpush1.bf16.msra.mxu0 0
  %117 = vmatprep.subr.bf16.mxu0 0
  %118 = vmatpush1.bf16.msra.mxu0 0
  %119 = vmatprep.subr.bf16.mxu0 0
  %120 = vmatpush1.bf16.msra.mxu0 0
  %121 = vmatprep.subr.bf16.mxu0 0
  %122 = vmatpush1.bf16.msra.mxu0 0
  %123 = vmatprep.subr.bf16.mxu0 0
  %124 = vmatpush1.bf16.msra.mxu0 0
  %125 = vmatprep.subr.bf16.mxu0 0
  %126 = vmatpush1.bf16.msra.mxu0 0
  %127 = vmatprep.subr.bf16.mxu0 0
  %128 = vmatpush1.bf16.msra.mxu0 0
  %129 = vmatprep.subr.bf16.mxu0 0
  %130 = vmatpush1.bf16.msra.mxu0 0
  %131 = vmatprep.mubr.bf16.mxu0 0
  %132 = vmatmul.mubr.bf16.gmra.mrb[0].mxu0 %v49
  %v133 = vpop.f32.mrb[0].mxu0
  %v134 = vadd.f32 0.0, %v133
  %v135 = vpop.f32.mrb[0].mxu0
  %v136 = vpop.f32.mrb[0].mxu0
  %v137 = vadd.f32 0.0, %v136
  %v138 = vpop.f32.mrb[0].mxu0
  %139 = vdwg.mxu0
  %v140 = vadd.f32 %v25, %v134
  %v141 = vadd.f32 %v26, %v137
  %vm142 = vcmask 261120
  %143 = vst.msk [vmem:[#allocation2] sm:$0xff] %vm142, %v140
  %144 = vst.msk [vmem:[#allocation2 + $0x8] sm:$0xff] %vm142, %v141
  // Predicated region
  $region22: #{transformer_forward.11} parent=0 // pred_check
    %p145 = pneg %p18
  $region23: #{transformer_forward.11} parent=0 // pred_check_branch
    %147 = sbr.rel (%p145) target = $region25
  $region24: #{transformer_forward.11} parent=0 // pred_region
    %v148 = vld [vmem:[#allocation2] sm:$0xff]
    %v149 = vld [vmem:[#allocation2 + $0x8] sm:$0xff]
    %v150 = vld [vmem:[%s2] sm:$0x1]
    %v152 = vlaneseq
    %v153 = vshrl.u32 %v152, 7
    %v154 = vsub.s32 0, %v153
    %v155 = vrot.slane %v150, %v154
    %v157 = vadd.f32 %v148, %v155
    %v158 = vadd.f32 %v149, %v155
    %v159 = vld [vmem:[%s3] sm:$0xff]
    %v160 = vld [vmem:[%s3 + $0x8] sm:$0xff]
    %v161 = vadd.f32 %v157, %v159
    %v162 = vadd.f32 %v158, %v160
    %163 = vst.msk [vmem:[%s4] sm:$0xff] %vm142, %v161
    %164 = vst.msk [vmem:[%s4 + $0x8] sm:$0xff] %vm142, %v162
  $region25: #{transformer_forward.11} parent=0 // pred_fallthru
    _
  // Predicated region
  $region26: #{transformer_forward.11} parent=0 // pred_check
    _
  $region27: #{transformer_forward.11} parent=0 // pred_check_branch
    %166 = sbr.rel (0) target = $region29
  $region28: #{transformer_forward.11} parent=0 // pred_region
    _
  $region29: #{transformer_forward.11} parent=0 // pred_fallthru
    _
  // Predicated region
  $region30: #{transformer_forward.11} parent=0 // pred_check
    _
  $region31: #{transformer_forward.11} parent=0 // pred_check_branch
    %168 = sbr.rel (0) target = $region33
  $region32: #{transformer_forward.11} parent=0 // pred_region
    _
  $region33: #{transformer_forward.11} parent=0 // pred_fallthru
    _

</llo_original>
